<compile_context>
chip_gen: v6e
topology: v6e:2x2x1
jax: 0.10.0
libtpu: 0.0.40
codegen_flags: <defaults>
</compile_context>

<pallas_src>
import functools

import jax
import jax.numpy as jnp
from jax.experimental import pallas as pl
from jax.experimental.pallas import tpu as pltpu

# ---- architecture sizes ------------------------------------------------------
CIN = 3                      # xyz input channels
CIN_PAD = 8                  # input channels padded for friendly contraction
C1, C2, C3 = 32, 64, 128     # pointwise conv channels
F1, F2 = 64, 32              # fc hidden dims
K = 16                       # number of predicted coefficients
CPAD = 128                   # every layer output padded to 128 lanes

# logical layer shapes (cin, cout)
LAYER_DIMS = [(CIN, C1), (C1, C2), (C2, C3), (C3, F1), (F1, F2), (F2, K)]


def coeff_kernel(x_ref, w1_ref, wp_ref, b_ref, out_ref, gmax_ref,
                 *, tb, tn, use_tanh):
    """One grid step: TB batch elements x {src,dst} x TN points."""
    t = pl.program_id(1)
    last_t = pl.num_programs(1) - 1

    # (re)initialize the per-cloud running max at the first N-tile
    @pl.when(t == 0)
    def _init():
        gmax_ref[...] = jnp.full(gmax_ref.shape, -jnp.inf, gmax_ref.dtype)

    # ---- pointwise conv stack on this tile: one big matmul per layer --------
    x = x_ref[...].reshape(tb * 2 * tn, CIN_PAD)               # bf16 (M, 8)
    h = jnp.dot(x, w1_ref[...], preferred_element_type=jnp.float32) + b_ref[0]
    h = jnp.maximum(h, 0.0)
    for i in range(2):                                         # conv layers 2, 3
        h = jnp.dot(h.astype(jnp.bfloat16), wp_ref[i],
                    preferred_element_type=jnp.float32) + b_ref[i + 1]
        h = jnp.maximum(h, 0.0)                                # (M, 128) f32

    # ---- per-cloud max over this tile's points -> running max ---------------
    for r in range(2 * tb):                                    # tiny static loop
        gi = jnp.max(h[r * tn:(r + 1) * tn, :], axis=0, keepdims=True)
        gmax_ref[r:r + 1, :] = jnp.maximum(gmax_ref[r:r + 1, :], gi)

    # ---- FC head + tanh, once the whole cloud has been pooled ---------------
    @pl.when(t == last_t)
    def _head():
        f = gmax_ref[...]                                      # (2*tb, 128) f32
        for i in range(2, 4):                                  # fc 128->64, 64->32
            f = jnp.dot(f.astype(jnp.bfloat16), wp_ref[i],
                        preferred_element_type=jnp.float32) + b_ref[i + 1]
            f = jnp.maximum(f, 0.0)
        o = jnp.dot(f.astype(jnp.bfloat16), wp_ref[4],
                    preferred_element_type=jnp.float32) + b_ref[5]
        if use_tanh:
            o = jnp.tanh(o)
        out_ref[0] = o.astype(out_ref.dtype)                   # lane-dense store


def init_params(key):
    """Deterministic synthetic logical weights: [(w (cin,cout), b (cout,)), ...]."""
    params = []
    for cin, cout in LAYER_DIMS:
        key, kw, kb = jax.random.split(key, 3)
        w = jax.random.normal(kw, (cin, cout), jnp.float32) * 0.1
        b = jax.random.normal(kb, (cout,), jnp.float32) * 0.01
        params.append((w, b))
    return params


def pack_params(params):
    """Pack logical weights into MXU-friendly, lane-dense buffers.

    w1: (8, 128) bf16     -- layer 1, real block in [:3, :32], rest zero
    wp: (5, 128, 128) bf16 -- layers 2..6, real (cin, cout) block top-left
    bp: (6, 1, 128) f32   -- zero-padded biases (padded lanes stay exactly 0
                             through ReLU / the final linear layer)
    """
    # TODO(synk): fold trained BatchNorm scale/shift into these packed weights
    # when loading real PointNetCls parameters (here BN == identity).
    w1 = jnp.zeros((CIN_PAD, CPAD), jnp.float32).at[:CIN, :C1].set(params[0][0])
    wp = jnp.zeros((5, CPAD, CPAD), jnp.float32)
    bp = jnp.zeros((6, 1, CPAD), jnp.float32)
    for i, (w, b) in enumerate(params):
        if i > 0:
            wp = wp.at[i - 1, :w.shape[0], :w.shape[1]].set(w)
        bp = bp.at[i, 0, :b.shape[0]].set(b)
    return w1.astype(jnp.bfloat16), wp.astype(jnp.bfloat16), bp


@functools.partial(jax.jit, static_argnames=("use_tanh", "tb", "tn"))
def raw_coefficient_net_v0(pc_src, pc_dst, packed, use_tanh=True, tb=2, tn=256):
    """pc_src, pc_dst: (B, 3, N) float32 (PyTorch NCW).  Returns (B, K)."""
    w1, wp, bp = packed
    B, cin, N = pc_src.shape
    assert cin == CIN
    TB = min(tb, B)
    TN = min(tn, N)
    assert B % TB == 0 and N % TN == 0 and TN % 8 == 0

    # single fused prep pass: stack src/dst, NCW->NWC, pad 3->8 channels, bf16
    x = jnp.stack([pc_src, pc_dst], axis=1)                    # (B, 2, 3, N)
    x = jnp.transpose(x, (0, 1, 3, 2))                         # (B, 2, N, 3)
    x = jnp.pad(x, ((0, 0), (0, 0), (0, 0), (0, CIN_PAD - CIN)))
    x = x.astype(jnp.bfloat16)                                 # (B, 2, N, 8)

    kernel = functools.partial(coeff_kernel, tb=TB, tn=TN, use_tanh=use_tanh)
    out = pl.pallas_call(
        kernel,
        out_shape=jax.ShapeDtypeStruct((B // TB, 2 * TB, CPAD), jnp.float32),
        grid=(B // TB, N // TN),
        in_specs=[
            pl.BlockSpec((TB, 2, TN, CIN_PAD), lambda b, t: (b, 0, t, 0)),
            pl.BlockSpec(memory_space=pltpu.MemorySpace.VMEM),   # w1 (whole)
            pl.BlockSpec(memory_space=pltpu.MemorySpace.VMEM),   # wp (whole)
            pl.BlockSpec(memory_space=pltpu.MemorySpace.VMEM),   # bp (whole)
        ],
        out_specs=pl.BlockSpec((1, 2 * TB, CPAD), lambda b, t: (b, 0, 0)),
        scratch_shapes=[pltpu.VMEM((2 * TB, CPAD), jnp.float32)],
        compiler_params=pltpu.CompilerParams(
            dimension_semantics=("parallel", "arbitrary")),
    )(x, w1, wp, bp)

    o = out.reshape(B, 2, CPAD)            # per element: row 0 = src, row 1 = dst
    return o[:, 1, :K] - o[:, 0, :K]       # tanh(net(dst)) - tanh(net(src))


def reference(pc_src, pc_dst, params, use_tanh=True):
    """Pure-JAX f32 reference of the same forward pass."""
    def net(pc):
        h = jnp.transpose(pc, (0, 2, 1))                       # (B, N, 3)
        for i in range(3):
            w, b = params[i]
            h = jnp.maximum(jnp.einsum('bnc,co->bno', h, w) + b, 0.0)
        f = jnp.max(h, axis=1)                                 # (B, 128)
        for i in range(3, 5):
            w, b = params[i]
            f = jnp.maximum(f @ w + b, 0.0)
        w, b = params[5]
        o = f @ w + b
        return jnp.tanh(o) if use_tanh else o
    return net(pc_dst) - net(pc_src)


if __name__ == "__main__":
    key = jax.random.PRNGKey(0)
    k_params, k_src, k_dst = jax.random.split(key, 3)

    B, N = 4, 256
    params = init_params(k_params)
    packed = pack_params(params)
    pc_src = jax.random.normal(k_src, (B, CIN, N), jnp.float32)
    pc_dst = jax.random.normal(k_dst, (B, CIN, N), jnp.float32)

    # TB=2 -> 2 parallel batch-block steps (keeps both v7x TensorCores busy);
    # TN=128 -> 2 reduction steps (exercises the running-max accumulator path).
    coeff_offset = raw_coefficient_net_v0(pc_src, pc_dst, packed,
                                          use_tanh=True, tb=2, tn=128)
    coeff_offset = jax.block_until_ready(coeff_offset)

    ref = reference(pc_src, pc_dst, params, use_tanh=True)
    assert coeff_offset.shape == (B, K)
    err = float(jnp.max(jnp.abs(coeff_offset - ref)))
    # bf16 MXU operands with f32 accumulation -> looser tolerance than pure f32
    assert err < 2.5e-2, f"mismatch vs reference: max abs err = {err}"

    print("KERNEL_OK")
</pallas_src>

<mosaic_0001>
module attributes {stable_mosaic.version = 11 : i64} {
  func.func @coeff_kernel(%arg0: i32, %arg1: i32, %arg2: memref<2x2x128x8xbf16, #tpu.memory_space<vmem>>, %arg3: memref<8x128xbf16, #tpu.memory_space<vmem>>, %arg4: memref<5x128x128xbf16, #tpu.memory_space<vmem>>, %arg5: memref<6x1x128xf32, #tpu.memory_space<vmem>>, %arg6: memref<1x4x128xf32, #tpu.memory_space<vmem>>, %arg7: memref<4x128xf32, #tpu.memory_space<vmem>>) attributes {dimension_semantics = [#tpu.dimension_semantics<parallel>, #tpu.dimension_semantics<arbitrary>], iteration_bounds = array<i64: 2, 2>, scalar_prefetch = 0 : i64, scratch_operands = 1 : i64, tpu.core_type = #tpu.core_type<tc>, window_params = [{transform_indices = @transform_0, window_bounds = array<i64: 2, 2, 128, 8>}, {pipeline_mode = #tpu.pipeline_mode<synchronous>, transform_indices = @transform_1, window_bounds = array<i64: 8, 128>}, {pipeline_mode = #tpu.pipeline_mode<synchronous>, transform_indices = @transform_2, window_bounds = array<i64: 5, 128, 128>}, {pipeline_mode = #tpu.pipeline_mode<synchronous>, transform_indices = @transform_3, window_bounds = array<i64: 6, 1, 128>}, {transform_indices = @transform_4, window_bounds = array<i64: 1, 4, 128>}]} {
    %c0_i32 = arith.constant 0 : i32
    %0 = arith.cmpi eq, %arg1, %c0_i32 : i32
    %1 = arith.extui %0 : i1 to i32
    %c0_i32_0 = arith.constant 0 : i32
    %2 = arith.cmpi ne, %1, %c0_i32_0 : i32
    scf.if %2 {
      %cst_44 = arith.constant 0xFF800000 : f32
      %60 = vector.broadcast %cst_44 : f32 to vector<4x128xf32>
      %c0_45 = arith.constant 0 : index
      %c0_46 = arith.constant 0 : index
      %61 = vector.load %arg7[%c0_45, %c0_46] : memref<4x128xf32, #tpu.memory_space<vmem>>, vector<4x128xf32>
      tpu.vector_store %arg7[%c0_45, %c0_46], %60 {strides = array<i32>} : memref<4x128xf32, #tpu.memory_space<vmem>>, vector<4x128xf32>,
    } else {
    }
    %c0 = arith.constant 0 : index
    %c0_1 = arith.constant 0 : index
    %c0_2 = arith.constant 0 : index
    %c0_3 = arith.constant 0 : index
    %3 = vector.load %arg2[%c0, %c0_1, %c0_2, %c0_3] : memref<2x2x128x8xbf16, #tpu.memory_space<vmem>>, vector<2x2x128x8xbf16>
    %4 = vector.shape_cast %3 : vector<2x2x128x8xbf16> to vector<512x8xbf16>
    %c0_4 = arith.constant 0 : index
    %c0_5 = arith.constant 0 : index
    %5 = vector.load %arg3[%c0_4, %c0_5] : memref<8x128xbf16, #tpu.memory_space<vmem>>, vector<8x128xbf16>
    %cst = arith.constant dense<0.000000e+00> : vector<512x128xf32>
    %6 = tpu.matmul %4, %5, %cst {dimension_numbers = #tpu.dot_dimension_numbers<[1], [0], [0], [1], [0, 0, 1, 1], [], []>} : vector<512x8xbf16>, vector<8x128xbf16>, vector<512x128xf32> -> vector<512x128xf32>
    %c0_6 = arith.constant 0 : index
    %c0_7 = arith.constant 0 : index
    %c0_8 = arith.constant 0 : index
    %7 = vector.load %arg5[%c0_6, %c0_7, %c0_8] : memref<6x1x128xf32, #tpu.memory_space<vmem>>, vector<1x1x128xf32>
    %8 = vector.shape_cast %7 : vector<1x1x128xf32> to vector<1x128xf32>
    %9 = vector.broadcast %8 : vector<1x128xf32> to vector<512x128xf32>
    %10 = arith.addf %6, %9 : vector<512x128xf32>
    %cst_9 = arith.constant 0.000000e+00 : f32
    %11 = vector.broadcast %cst_9 : f32 to vector<512x128xf32>
    %12 = arith.maximumf %10, %11 : vector<512x128xf32>
    %13 = arith.truncf %12 : vector<512x128xf32> to vector<512x128xbf16>
    %c0_10 = arith.constant 0 : index
    %c0_11 = arith.constant 0 : index
    %c0_12 = arith.constant 0 : index
    %14 = vector.load %arg4[%c0_10, %c0_11, %c0_12] : memref<5x128x128xbf16, #tpu.memory_space<vmem>>, vector<1x128x128xbf16>
    %15 = vector.shape_cast %14 : vector<1x128x128xbf16> to vector<128x128xbf16>
    %cst_13 = arith.constant dense<0.000000e+00> : vector<512x128xf32>
    %16 = tpu.matmul %13, %15, %cst_13 {dimension_numbers = #tpu.dot_dimension_numbers<[1], [0], [0], [1], [0, 0, 1, 1], [], []>} : vector<512x128xbf16>, vector<128x128xbf16>, vector<512x128xf32> -> vector<512x128xf32>
    %c1 = arith.constant 1 : index
    %c0_14 = arith.constant 0 : index
    %c0_15 = arith.constant 0 : index
    %17 = vector.load %arg5[%c1, %c0_14, %c0_15] : memref<6x1x128xf32, #tpu.memory_space<vmem>>, vector<1x1x128xf32>
    %18 = vector.shape_cast %17 : vector<1x1x128xf32> to vector<1x128xf32>
    %19 = vector.broadcast %18 : vector<1x128xf32> to vector<512x128xf32>
    %20 = arith.addf %16, %19 : vector<512x128xf32>
    %cst_16 = arith.constant 0.000000e+00 : f32
    %21 = vector.broadcast %cst_16 : f32 to vector<512x128xf32>
    %22 = arith.maximumf %20, %21 : vector<512x128xf32>
    %23 = arith.truncf %22 : vector<512x128xf32> to vector<512x128xbf16>
    %c1_17 = arith.constant 1 : index
    %c0_18 = arith.constant 0 : index
    %c0_19 = arith.constant 0 : index
    %24 = vector.load %arg4[%c1_17, %c0_18, %c0_19] : memref<5x128x128xbf16, #tpu.memory_space<vmem>>, vector<1x128x128xbf16>
    %25 = vector.shape_cast %24 : vector<1x128x128xbf16> to vector<128x128xbf16>
    %cst_20 = arith.constant dense<0.000000e+00> : vector<512x128xf32>
    %26 = tpu.matmul %23, %25, %cst_20 {dimension_numbers = #tpu.dot_dimension_numbers<[1], [0], [0], [1], [0, 0, 1, 1], [], []>} : vector<512x128xbf16>, vector<128x128xbf16>, vector<512x128xf32> -> vector<512x128xf32>
    %c2 = arith.constant 2 : index
    %c0_21 = arith.constant 0 : index
    %c0_22 = arith.constant 0 : index
    %27 = vector.load %arg5[%c2, %c0_21, %c0_22] : memref<6x1x128xf32, #tpu.memory_space<vmem>>, vector<1x1x128xf32>
    %28 = vector.shape_cast %27 : vector<1x1x128xf32> to vector<1x128xf32>
    %29 = vector.broadcast %28 : vector<1x128xf32> to vector<512x128xf32>
    %30 = arith.addf %26, %29 : vector<512x128xf32>
    %cst_23 = arith.constant 0.000000e+00 : f32
    %31 = vector.broadcast %cst_23 : f32 to vector<512x128xf32>
    %32 = arith.maximumf %30, %31 : vector<512x128xf32>
    %33 = vector.extract_strided_slice %32 {offsets = [0, 0], sizes = [128, 128], strides = [1, 1]} : vector<512x128xf32> to vector<128x128xf32>
    %cst_24 = arith.constant dense<0xFF800000> : vector<128xf32>
    %34 = vector.multi_reduction <maximumf>, %33, %cst_24 [0] : vector<128x128xf32> to vector<128xf32>
    %35 = vector.shape_cast %34 : vector<128xf32> to vector<1x128xf32>
    %c0_25 = arith.constant 0 : index
    %c0_26 = arith.constant 0 : index
    %36 = vector.load %arg7[%c0_25, %c0_26] : memref<4x128xf32, #tpu.memory_space<vmem>>, vector<1x128xf32>
    %37 = arith.maximumf %36, %35 : vector<1x128xf32>
    %c0_27 = arith.constant 0 : index
    %c0_28 = arith.constant 0 : index
    %38 = vector.load %arg7[%c0_27, %c0_28] : memref<4x128xf32, #tpu.memory_space<vmem>>, vector<1x128xf32>
    tpu.vector_store %arg7[%c0_27, %c0_28], %37 {strides = array<i32>} : memref<4x128xf32, #tpu.memory_space<vmem>>, vector<1x128xf32>,
    %39 = vector.extract_strided_slice %32 {offsets = [128, 0], sizes = [128, 128], strides = [1, 1]} : vector<512x128xf32> to vector<128x128xf32>
    %cst_29 = arith.constant dense<0xFF800000> : vector<128xf32>
    %40 = vector.multi_reduction <maximumf>, %39, %cst_29 [0] : vector<128x128xf32> to vector<128xf32>
    %41 = vector.shape_cast %40 : vector<128xf32> to vector<1x128xf32>
    %c1_30 = arith.constant 1 : index
    %c0_31 = arith.constant 0 : index
    %42 = vector.load %arg7[%c1_30, %c0_31] : memref<4x128xf32, #tpu.memory_space<vmem>>, vector<1x128xf32>
    %43 = arith.maximumf %42, %41 : vector<1x128xf32>
    %c1_32 = arith.constant 1 : index
    %c0_33 = arith.constant 0 : index
    %44 = vector.load %arg7[%c1_32, %c0_33] : memref<4x128xf32, #tpu.memory_space<vmem>>, vector<1x128xf32>
    tpu.vector_store %arg7[%c1_32, %c0_33], %43 {strides = array<i32>} : memref<4x128xf32, #tpu.memory_space<vmem>>, vector<1x128xf32>,
    %45 = vector.extract_strided_slice %32 {offsets = [256, 0], sizes = [128, 128], strides = [1, 1]} : vector<512x128xf32> to vector<128x128xf32>
    %cst_34 = arith.constant dense<0xFF800000> : vector<128xf32>
    %46 = vector.multi_reduction <maximumf>, %45, %cst_34 [0] : vector<128x128xf32> to vector<128xf32>
    %47 = vector.shape_cast %46 : vector<128xf32> to vector<1x128xf32>
    %c2_35 = arith.constant 2 : index
    %c0_36 = arith.constant 0 : index
    %48 = vector.load %arg7[%c2_35, %c0_36] : memref<4x128xf32, #tpu.memory_space<vmem>>, vector<1x128xf32>
    %49 = arith.maximumf %48, %47 : vector<1x128xf32>
    %c2_37 = arith.constant 2 : index
    %c0_38 = arith.constant 0 : index
    %50 = vector.load %arg7[%c2_37, %c0_38] : memref<4x128xf32, #tpu.memory_space<vmem>>, vector<1x128xf32>
    tpu.vector_store %arg7[%c2_37, %c0_38], %49 {strides = array<i32>} : memref<4x128xf32, #tpu.memory_space<vmem>>, vector<1x128xf32>,
    %51 = vector.extract_strided_slice %32 {offsets = [384, 0], sizes = [128, 128], strides = [1, 1]} : vector<512x128xf32> to vector<128x128xf32>
    %cst_39 = arith.constant dense<0xFF800000> : vector<128xf32>
    %52 = vector.multi_reduction <maximumf>, %51, %cst_39 [0] : vector<128x128xf32> to vector<128xf32>
    %53 = vector.shape_cast %52 : vector<128xf32> to vector<1x128xf32>
    %c3 = arith.constant 3 : index
    %c0_40 = arith.constant 0 : index
    %54 = vector.load %arg7[%c3, %c0_40] : memref<4x128xf32, #tpu.memory_space<vmem>>, vector<1x128xf32>
    %55 = arith.maximumf %54, %53 : vector<1x128xf32>
    %c3_41 = arith.constant 3 : index
    %c0_42 = arith.constant 0 : index
    %56 = vector.load %arg7[%c3_41, %c0_42] : memref<4x128xf32, #tpu.memory_space<vmem>>, vector<1x128xf32>
    tpu.vector_store %arg7[%c3_41, %c0_42], %55 {strides = array<i32>} : memref<4x128xf32, #tpu.memory_space<vmem>>, vector<1x128xf32>,
    %c1_i32 = arith.constant 1 : i32
    %57 = arith.cmpi eq, %arg1, %c1_i32 : i32
    %58 = arith.extui %57 : i1 to i32
    %c0_i32_43 = arith.constant 0 : i32
    %59 = arith.cmpi ne, %58, %c0_i32_43 : i32
    scf.if %59 {
      %c0_44 = arith.constant 0 : index
      %c0_45 = arith.constant 0 : index
      %60 = vector.load %arg7[%c0_44, %c0_45] : memref<4x128xf32, #tpu.memory_space<vmem>>, vector<4x128xf32>
      %61 = arith.truncf %60 : vector<4x128xf32> to vector<4x128xbf16>
      %c2_46 = arith.constant 2 : index
      %c0_47 = arith.constant 0 : index
      %c0_48 = arith.constant 0 : index
      %62 = vector.load %arg4[%c2_46, %c0_47, %c0_48] : memref<5x128x128xbf16, #tpu.memory_space<vmem>>, vector<1x128x128xbf16>
      %63 = vector.shape_cast %62 : vector<1x128x128xbf16> to vector<128x128xbf16>
      %cst_49 = arith.constant dense<0.000000e+00> : vector<4x128xf32>
      %64 = tpu.matmul %61, %63, %cst_49 {dimension_numbers = #tpu.dot_dimension_numbers<[1], [0], [0], [1], [0, 0, 1, 1], [], []>} : vector<4x128xbf16>, vector<128x128xbf16>, vector<4x128xf32> -> vector<4x128xf32>
      %c3_50 = arith.constant 3 : index
      %c0_51 = arith.constant 0 : index
      %c0_52 = arith.constant 0 : index
      %65 = vector.load %arg5[%c3_50, %c0_51, %c0_52] : memref<6x1x128xf32, #tpu.memory_space<vmem>>, vector<1x1x128xf32>
      %66 = vector.shape_cast %65 : vector<1x1x128xf32> to vector<1x128xf32>
      %67 = vector.broadcast %66 : vector<1x128xf32> to vector<4x128xf32>
      %68 = arith.addf %64, %67 : vector<4x128xf32>
      %cst_53 = arith.constant 0.000000e+00 : f32
      %69 = vector.broadcast %cst_53 : f32 to vector<4x128xf32>
      %70 = arith.maximumf %68, %69 : vector<4x128xf32>
      %71 = arith.truncf %70 : vector<4x128xf32> to vector<4x128xbf16>
      %c3_54 = arith.constant 3 : index
      %c0_55 = arith.constant 0 : index
      %c0_56 = arith.constant 0 : index
      %72 = vector.load %arg4[%c3_54, %c0_55, %c0_56] : memref<5x128x128xbf16, #tpu.memory_space<vmem>>, vector<1x128x128xbf16>
      %73 = vector.shape_cast %72 : vector<1x128x128xbf16> to vector<128x128xbf16>
      %cst_57 = arith.constant dense<0.000000e+00> : vector<4x128xf32>
      %74 = tpu.matmul %71, %73, %cst_57 {dimension_numbers = #tpu.dot_dimension_numbers<[1], [0], [0], [1], [0, 0, 1, 1], [], []>} : vector<4x128xbf16>, vector<128x128xbf16>, vector<4x128xf32> -> vector<4x128xf32>
      %c4 = arith.constant 4 : index
      %c0_58 = arith.constant 0 : index
      %c0_59 = arith.constant 0 : index
      %75 = vector.load %arg5[%c4, %c0_58, %c0_59] : memref<6x1x128xf32, #tpu.memory_space<vmem>>, vector<1x1x128xf32>
      %76 = vector.shape_cast %75 : vector<1x1x128xf32> to vector<1x128xf32>
      %77 = vector.broadcast %76 : vector<1x128xf32> to vector<4x128xf32>
      %78 = arith.addf %74, %77 : vector<4x128xf32>
      %cst_60 = arith.constant 0.000000e+00 : f32
      %79 = vector.broadcast %cst_60 : f32 to vector<4x128xf32>
      %80 = arith.maximumf %78, %79 : vector<4x128xf32>
      %81 = arith.truncf %80 : vector<4x128xf32> to vector<4x128xbf16>
      %c4_61 = arith.constant 4 : index
      %c0_62 = arith.constant 0 : index
      %c0_63 = arith.constant 0 : index
      %82 = vector.load %arg4[%c4_61, %c0_62, %c0_63] : memref<5x128x128xbf16, #tpu.memory_space<vmem>>, vector<1x128x128xbf16>
      %83 = vector.shape_cast %82 : vector<1x128x128xbf16> to vector<128x128xbf16>
      %cst_64 = arith.constant dense<0.000000e+00> : vector<4x128xf32>
      %84 = tpu.matmul %81, %83, %cst_64 {dimension_numbers = #tpu.dot_dimension_numbers<[1], [0], [0], [1], [0, 0, 1, 1], [], []>} : vector<4x128xbf16>, vector<128x128xbf16>, vector<4x128xf32> -> vector<4x128xf32>
      %c5 = arith.constant 5 : index
      %c0_65 = arith.constant 0 : index
      %c0_66 = arith.constant 0 : index
      %85 = vector.load %arg5[%c5, %c0_65, %c0_66] : memref<6x1x128xf32, #tpu.memory_space<vmem>>, vector<1x1x128xf32>
      %86 = vector.shape_cast %85 : vector<1x1x128xf32> to vector<1x128xf32>
      %87 = vector.broadcast %86 : vector<1x128xf32> to vector<4x128xf32>
      %88 = arith.addf %84, %87 : vector<4x128xf32>
      %89 = math.tanh %88 : vector<4x128xf32>
      %c0_67 = arith.constant 0 : index
      %c0_68 = arith.constant 0 : index
      %c0_69 = arith.constant 0 : index
      %90 = vector.load %arg6[%c0_67, %c0_68, %c0_69] : memref<1x4x128xf32, #tpu.memory_space<vmem>>, vector<1x4x128xf32>
      %91 = vector.shape_cast %90 : vector<1x4x128xf32> to vector<4x128xf32>
      %92 = vector.shape_cast %89 : vector<4x128xf32> to vector<1x4x128xf32>
      tpu.vector_store %arg6[%c0_67, %c0_68, %c0_69], %92 {strides = array<i32>} : memref<1x4x128xf32, #tpu.memory_space<vmem>>, vector<1x4x128xf32>,
    } else {
    }
    return
  }
  func.func @transform_0(%arg0: i32, %arg1: i32) -> (i32, i32, i32, i32) {
    %c0_i32 = arith.constant 0 : i32
    %c0_i32_0 = arith.constant 0 : i32
    %c0_i32_1 = arith.constant 0 : i32
    return %arg0, %c0_i32, %arg1, %c0_i32_0 : i32, i32, i32, i32
  }
  func.func @transform_1(%arg0: i32, %arg1: i32) -> (i32, i32) {
    %c0_i32 = arith.constant 0 : i32
    %c0_i32_0 = arith.constant 0 : i32
    %c0_i32_1 = arith.constant 0 : i32
    return %c0_i32, %c0_i32_0 : i32, i32
  }
  func.func @transform_2(%arg0: i32, %arg1: i32) -> (i32, i32, i32) {
    %c0_i32 = arith.constant 0 : i32
    %c0_i32_0 = arith.constant 0 : i32
    %c0_i32_1 = arith.constant 0 : i32
    %c0_i32_2 = arith.constant 0 : i32
    return %c0_i32, %c0_i32_0, %c0_i32_1 : i32, i32, i32
  }
  func.func @transform_3(%arg0: i32, %arg1: i32) -> (i32, i32, i32) {
    %c0_i32 = arith.constant 0 : i32
    %c0_i32_0 = arith.constant 0 : i32
    %c0_i32_1 = arith.constant 0 : i32
    %c0_i32_2 = arith.constant 0 : i32
    return %c0_i32, %c0_i32_0, %c0_i32_1 : i32, i32, i32
  }
  func.func @transform_4(%arg0: i32, %arg1: i32) -> (i32, i32, i32) {
    %c0_i32 = arith.constant 0 : i32
    %c0_i32_0 = arith.constant 0 : i32
    %c0_i32_1 = arith.constant 0 : i32
    return %arg0, %c0_i32, %c0_i32_0 : i32, i32, i32
  }
}

</mosaic_0001>

<llo_original>
// kernel: raw_coefficient_net_v0.1
$region0: #{raw_coefficient_net_v0.1}
  #allocation0 [shape = 'u32[]', space=smem, size = 0x4, offset = 0x4, fixed_abs, tag = 'smem constant byte address 0x4 - core index']
  #allocation1 [shape = 'u32[144,128]{1,0:T(1,128)}', space=vmem, size = 0x12000, scoped, tag = 'internal scratch']
  #allocation2 [shape = 'f32[4,128]{1,0:T(4,128)}', space=vmem, size = 0x800, scoped, tag = 'scratch operand']
  %s0 = inlined_call_operand.vmem [shape: bf16[4,2,256,8], index: 0, kind: input, shape index: {}]
  %s1 = inlined_call_operand.vmem [shape: bf16[8,128], index: 1, kind: input, shape index: {}]
  %s2 = inlined_call_operand.vmem [shape: bf16[5,128,128], index: 2, kind: input, shape index: {}]
  %s3 = inlined_call_operand.vmem [shape: f32[6,1,128], index: 3, kind: input, shape index: {}]
  %s4 = inlined_call_operand.vmem [shape: f32[2,4,128], index: 4, kind: output, shape index: {}]
  %s5 = sld [smem:[#allocation0]]
  $region98: #{raw_coefficient_net_v0.1} parent=0
    _
  %s7 = ssub.s32 1, %s5
  %s8 = scalar_select 0, %s7, %s5
  $region1: #{raw_coefficient_net_v0.1} parent=0
    #allocation3 [shape = 'u8[262144]{0}', space=vmem, size = 0x40000, scoped, tag = 'input window, operand 0']
    loop: start=0, step=1, limit=6
    $region2: #{raw_coefficient_net_v0.1} parent=1 // loop_pre_header
      _
    $region3: #{raw_coefficient_net_v0.1} parent=1 // loop_header
      %s10 = sphi 0, %s14
      %p11 = scmp.ge.s32.totalorder %s10, 6
      %s17 = sphi 0, %s29
      %s18 = sphi 0, %s25
      %s19 = sphi 0, %s17
      %s20 = sphi 0, %s18
      %s21 = sphi 0, %s19
      %s22 = sphi 0, %s20
      %s34 = sphi 0, %s36
      %s37 = sphi 0, %s34
      %s38 = sphi 0, %s37
      %s54 = sphi 0, %s38
      %s58 = sphi 0, %s58
      %s60 = sphi 0, %s58
      %s61 = sphi 0, %s60
      %s75 = sphi 0, %s61
      %s79 = sphi 0, %s79
      %s81 = sphi 0, %s79
      %s82 = sphi 0, %s81
      %s96 = sphi 0, %s82
      %s100 = sphi 0, %s100
      %s102 = sphi 0, %s100
      %s103 = sphi 0, %s102
      %s117 = sphi 0, %s103
      %s123 = sphi 0, %s125
      %s126 = sphi 0, %s123
      %s127 = sphi 0, %s126
      %s143 = sphi 0, %s127
    $region4: #{raw_coefficient_net_v0.1} parent=1 // loop_header_branch
      %13 = sbr.rel (%p11) target = $region8
    $region5: #{raw_coefficient_net_v0.1} parent=1 // loop_body
      %s15 = ssub.s32 %s10, 1
      %s16 = ssub.s32 %s10, 2
      %s23 = sadd.s32 1, %s18
      %p24 = scmp.ge.s32.totalorder %s23, 2
      %s25 = scalar_select %p24, 0, %s23
      %s26 = sadd.s32 1, %s17
      %s27 = scalar_select %p24, %s26, %s17
      %p28 = scmp.ge.s32.totalorder %s27, 2
      %s29 = scalar_select %p28, 0, %s27
      %s30 = ssub.s32 %s17, %s29
      %s31 = ssub.s32 %s18, %s25
      %s32 = sor.u32 %s30, %s31
      %p33 = scmp.eq.s32.totalorder %s32, 0
      %s35 = sadd.s32 %s34, 1
      %s36 = scalar_select %p33, %s34, %s35
      %p39 = pneg %p33
      %p40 = scmp.eq.s32.totalorder %s10, 3
      %p41 = por %p39, %p40
      %p42 = scmp.ne.s32.totalorder %s34, %s37
      %p43 = scmp.eq.s32.totalorder %s10, 0
      %p44 = por %p42, %p43
      %p45 = scmp.ne.s32.totalorder %s34, %s37
      %p46 = scmp.eq.s32.totalorder %s15, 3
      %p47 = por %p45, %p46
      %p48 = scmp.ne.s32.totalorder %s37, %s38
      %p49 = scmp.eq.s32.totalorder %s15, 0
      %p50 = por %p48, %p49
      %p51 = scmp.ne.s32.totalorder %s37, %s38
      %p52 = scmp.eq.s32.totalorder %s16, 3
      %p53 = por %p51, %p52
      %p55 = scmp.ne.s32.totalorder %s38, %s54
      %p56 = scmp.eq.s32.totalorder %s16, 0
      %p57 = por %p55, %p56
      %s59 = sadd.s32 %s58, 1
      %p62 = scmp.eq.s32.totalorder %s10, 3
      %p63 = scmp.ne.s32.totalorder %s58, %s60
      %p64 = scmp.eq.s32.totalorder %s10, 0
      %p65 = por %p63, %p64
      %p66 = scmp.ne.s32.totalorder %s58, %s60
      %p67 = scmp.eq.s32.totalorder %s15, 3
      %p68 = por %p66, %p67
      %p69 = scmp.ne.s32.totalorder %s60, %s61
      %p70 = scmp.eq.s32.totalorder %s15, 0
      %p71 = por %p69, %p70
      %p72 = scmp.ne.s32.totalorder %s60, %s61
      %p73 = scmp.eq.s32.totalorder %s16, 3
      %p74 = por %p72, %p73
      %p76 = scmp.ne.s32.totalorder %s61, %s75
      %p77 = scmp.eq.s32.totalorder %s16, 0
      %p78 = por %p76, %p77
      %s80 = sadd.s32 %s79, 1
      %p83 = scmp.eq.s32.totalorder %s10, 3
      %p84 = scmp.ne.s32.totalorder %s79, %s81
      %p85 = scmp.eq.s32.totalorder %s10, 0
      %p86 = por %p84, %p85
      %p87 = scmp.ne.s32.totalorder %s79, %s81
      %p88 = scmp.eq.s32.totalorder %s15, 3
      %p89 = por %p87, %p88
      %p90 = scmp.ne.s32.totalorder %s81, %s82
      %p91 = scmp.eq.s32.totalorder %s15, 0
      %p92 = por %p90, %p91
      %p93 = scmp.ne.s32.totalorder %s81, %s82
      %p94 = scmp.eq.s32.totalorder %s16, 3
      %p95 = por %p93, %p94
      %p97 = scmp.ne.s32.totalorder %s82, %s96
      %p98 = scmp.eq.s32.totalorder %s16, 0
      %p99 = por %p97, %p98
      %s101 = sadd.s32 %s100, 1
      %p104 = scmp.eq.s32.totalorder %s10, 3
      %p105 = scmp.ne.s32.totalorder %s100, %s102
      %p106 = scmp.eq.s32.totalorder %s10, 0
      %p107 = por %p105, %p106
      %p108 = scmp.ne.s32.totalorder %s100, %s102
      %p109 = scmp.eq.s32.totalorder %s15, 3
      %p110 = por %p108, %p109
      %p111 = scmp.ne.s32.totalorder %s102, %s103
      %p112 = scmp.eq.s32.totalorder %s15, 0
      %p113 = por %p111, %p112
      %p114 = scmp.ne.s32.totalorder %s102, %s103
      %p115 = scmp.eq.s32.totalorder %s16, 3
      %p116 = por %p114, %p115
      %p118 = scmp.ne.s32.totalorder %s103, %s117
      %p119 = scmp.eq.s32.totalorder %s16, 0
      %p120 = por %p118, %p119
      %s121 = ssub.s32 %s17, %s29
      %p122 = scmp.eq.s32.totalorder %s121, 0
      %s124 = sadd.s32 %s123, 1
      %s125 = scalar_select %p122, %s123, %s124
      %p128 = pneg %p122
      %p129 = scmp.eq.s32.totalorder %s10, 3
      %p130 = por %p128, %p129
      %p131 = scmp.ne.s32.totalorder %s123, %s126
      %p132 = scmp.eq.s32.totalorder %s10, 0
      %p133 = por %p131, %p132
      %p134 = scmp.ne.s32.totalorder %s123, %s126
      %p135 = scmp.eq.s32.totalorder %s15, 3
      %p136 = por %p134, %p135
      %p137 = scmp.ne.s32.totalorder %s126, %s127
      %p138 = scmp.eq.s32.totalorder %s15, 0
      %p139 = por %p137, %p138
      %p140 = scmp.ne.s32.totalorder %s126, %s127
      %p141 = scmp.eq.s32.totalorder %s16, 3
      %p142 = por %p140, %p141
      %p144 = scmp.ne.s32.totalorder %s127, %s143
      %p145 = scmp.eq.s32.totalorder %s16, 0
      %p146 = por %p144, %p145
      %p147 = scmp.le.s32.totalorder 1, %s10
      %p148 = scmp.lt.s32.totalorder %s10, 5
      %p149 = pnand %p147, %p148
      %p150 = pneg %p149
      // Predicated region
      $region9: #{raw_coefficient_net_v0.1} parent=5 // pred_check
        _
      $region10: #{raw_coefficient_net_v0.1} parent=5 // pred_check_branch
        %152 = sbr.rel (%p149) target = $region12
      $region11: #{raw_coefficient_net_v0.1} parent=5 // pred_region
        %s153 = ssub.s32 %s10, 1
        // Predicated region
        $region13: #{raw_coefficient_net_v0.1} parent=11 // pred_check
          %p154 = pneg %p71
        $region14: #{raw_coefficient_net_v0.1} parent=11 // pred_check_branch
          %156 = sbr.rel (%p154) target = $region16
        $region15: #{raw_coefficient_net_v0.1} parent=11 // pred_region
          _
        $region16: #{raw_coefficient_net_v0.1} parent=11 // pred_fallthru
          _
        // Predicated region
        $region17: #{raw_coefficient_net_v0.1} parent=11 // pred_check
          %p157 = pneg %p92
        $region18: #{raw_coefficient_net_v0.1} parent=11 // pred_check_branch
          %159 = sbr.rel (%p157) target = $region20
        $region19: #{raw_coefficient_net_v0.1} parent=11 // pred_region
          _
        $region20: #{raw_coefficient_net_v0.1} parent=11 // pred_fallthru
          _
        // Predicated region
        $region21: #{raw_coefficient_net_v0.1} parent=11 // pred_check
          %p160 = pneg %p113
        $region22: #{raw_coefficient_net_v0.1} parent=11 // pred_check_branch
          %162 = sbr.rel (%p160) target = $region24
        $region23: #{raw_coefficient_net_v0.1} parent=11 // pred_region
          _
        $region24: #{raw_coefficient_net_v0.1} parent=11 // pred_fallthru
          _
      $region12: #{raw_coefficient_net_v0.1} parent=5 // pred_fallthru
        _
      %p163 = scmp.lt.s32.totalorder %s10, 4
      // Predicated region
      $region25: #{raw_coefficient_net_v0.1} parent=5 // pred_check
        %p164 = pneg %p163
      $region26: #{raw_coefficient_net_v0.1} parent=5 // pred_check_branch
        %166 = sbr.rel (%p164) target = $region28
      $region27: #{raw_coefficient_net_v0.1} parent=5 // pred_region
        // Predicated region
        $region29: #{raw_coefficient_net_v0.1} parent=27 // pred_check
          %p167 = pneg %p44
        $region30: #{raw_coefficient_net_v0.1} parent=27 // pred_check_branch
          %169 = sbr.rel (%p167) target = $region32
        $region31: #{raw_coefficient_net_v0.1} parent=27 // pred_region
          %s170 = sand.u32 %s34, 1
          %s171 = sand.u32 %s34, 1
          %s172 = smul.addr %s171, 256
          %s173 = scalar_lea.vmem [#allocation3], %s172
          %s174 = smul.u32 2, %s17
          %s175 = smul.u32 16, %s18
          %s176 = smul.addr %s174, 64
          %s177 = sadd.s32 %s175, %s176
          %s178 = smul.addr %s177, 4
          %s179 = scalar_lea.vmem %s0, %s178
          // Predicated region
          $region33: #{raw_coefficient_net_v0.1} parent=31 // pred_check
            _
          $region34: #{raw_coefficient_net_v0.1} parent=31 // pred_check_branch
            %181 = sbr.rel (0) target = $region36
          $region35: #{raw_coefficient_net_v0.1} parent=31 // pred_region
            // Predicated region
            $region37: #{raw_coefficient_net_v0.1} parent=35 // pred_check
              _
            $region38: #{raw_coefficient_net_v0.1} parent=35 // pred_check_branch
              %183 = sbr.rel target = $region40
            $region39: #{raw_coefficient_net_v0.1} parent=35 // pred_region
              // Predicated region
              $region52: #{raw_coefficient_net_v0.1} parent=39 // pred_check
                _
              $region53: #{raw_coefficient_net_v0.1} parent=39 // pred_check_branch
                %325 = sbr.rel (0) target = $region55
              $region54: #{raw_coefficient_net_v0.1} parent=39 // pred_region
                loop: start=0, step=1, limit=1
                $region56: #{raw_coefficient_net_v0.1} parent=54 // loop_pre_header
                  _
                $region57: #{raw_coefficient_net_v0.1} parent=54 // loop_header
                  %s327 = sphi 0, %s331
                  %p328 = scmp.ge.s32.totalorder %s327, 1
                  %s332 = sphi %s179, %s179
                  %s333 = sphi %s173, %s173
                $region58: #{raw_coefficient_net_v0.1} parent=54 // loop_header_branch
                  %330 = sbr.rel (%p328) target = $region62
                $region59: #{raw_coefficient_net_v0.1} parent=54 // loop_body
                  _
                $region60: #{raw_coefficient_net_v0.1} parent=54 // loop_footer
                  %s331 = sadd.s32 1, %s327
                $region61: #{raw_coefficient_net_v0.1} parent=54 // loop_footer_branch
                  %326 = sbr.rel target = $region57
                $region62: #{raw_coefficient_net_v0.1} parent=54 // loop_exit
                  _
                %s335 = ssub.s32 16, 1
                loop: start=0, step=1, limit=1
                $region63: #{raw_coefficient_net_v0.1} parent=54 // loop_pre_header
                  _
                $region64: #{raw_coefficient_net_v0.1} parent=54 // loop_header
                  %s337 = sphi 0, %s341
                  %p338 = scmp.ge.s32.totalorder %s337, 1
                  %s342 = sphi %s179, %s179
                  %s343 = sphi %s173, %s173
                $region65: #{raw_coefficient_net_v0.1} parent=54 // loop_header_branch
                  %340 = sbr.rel (%p338) target = $region69
                $region66: #{raw_coefficient_net_v0.1} parent=54 // loop_body
                  %v344 = vld [vmem:[%s342] sm:%s335]
                  %345 = vst [vmem:[%s343] sm:%s335] %v344
                  %v346 = vld [vmem:[%s342 + $0x4] sm:%s335]
                  %347 = vst [vmem:[%s343 + $0x4] sm:%s335] %v346
                  %v348 = vld [vmem:[%s342 + $0x8] sm:%s335]
                  %349 = vst [vmem:[%s343 + $0x8] sm:%s335] %v348
                  %v350 = vld [vmem:[%s342 + $0xc] sm:%s335]
                  %351 = vst [vmem:[%s343 + $0xc] sm:%s335] %v350
                  %v352 = vld [vmem:[%s342 + $0x10] sm:%s335]
                  %353 = vst [vmem:[%s343 + $0x10] sm:%s335] %v352
                  %v354 = vld [vmem:[%s342 + $0x14] sm:%s335]
                  %355 = vst [vmem:[%s343 + $0x14] sm:%s335] %v354
                  %v356 = vld [vmem:[%s342 + $0x18] sm:%s335]
                  %357 = vst [vmem:[%s343 + $0x18] sm:%s335] %v356
                  %v358 = vld [vmem:[%s342 + $0x1c] sm:%s335]
                  %359 = vst [vmem:[%s343 + $0x1c] sm:%s335] %v358
                  %v360 = vld [vmem:[%s342 + $0x20] sm:%s335]
                  %361 = vst [vmem:[%s343 + $0x20] sm:%s335] %v360
                  %v362 = vld [vmem:[%s342 + $0x24] sm:%s335]
                  %363 = vst [vmem:[%s343 + $0x24] sm:%s335] %v362
                  %v364 = vld [vmem:[%s342 + $0x28] sm:%s335]
                  %365 = vst [vmem:[%s343 + $0x28] sm:%s335] %v364
                  %v366 = vld [vmem:[%s342 + $0x2c] sm:%s335]
                  %367 = vst [vmem:[%s343 + $0x2c] sm:%s335] %v366
                  %v368 = vld [vmem:[%s342 + $0x30] sm:%s335]
                  %369 = vst [vmem:[%s343 + $0x30] sm:%s335] %v368
                  %v370 = vld [vmem:[%s342 + $0x34] sm:%s335]
                  %371 = vst [vmem:[%s343 + $0x34] sm:%s335] %v370
                  %v372 = vld [vmem:[%s342 + $0x38] sm:%s335]
                  %373 = vst [vmem:[%s343 + $0x38] sm:%s335] %v372
                  %v374 = vld [vmem:[%s342 + $0x3c] sm:%s335]
                  %375 = vst [vmem:[%s343 + $0x3c] sm:%s335] %v374
                  %v376 = vld [vmem:[%s342 + $0x80] sm:%s335]
                  %377 = vst [vmem:[%s343 + $0x40] sm:%s335] %v376
                  %v378 = vld [vmem:[%s342 + $0x84] sm:%s335]
                  %379 = vst [vmem:[%s343 + $0x44] sm:%s335] %v378
                  %v380 = vld [vmem:[%s342 + $0x88] sm:%s335]
                  %381 = vst [vmem:[%s343 + $0x48] sm:%s335] %v380
                  %v382 = vld [vmem:[%s342 + $0x8c] sm:%s335]
                  %383 = vst [vmem:[%s343 + $0x4c] sm:%s335] %v382
                  %v384 = vld [vmem:[%s342 + $0x90] sm:%s335]
                  %385 = vst [vmem:[%s343 + $0x50] sm:%s335] %v384
                  %v386 = vld [vmem:[%s342 + $0x94] sm:%s335]
                  %387 = vst [vmem:[%s343 + $0x54] sm:%s335] %v386
                  %v388 = vld [vmem:[%s342 + $0x98] sm:%s335]
                  %389 = vst [vmem:[%s343 + $0x58] sm:%s335] %v388
                  %v390 = vld [vmem:[%s342 + $0x9c] sm:%s335]
                  %391 = vst [vmem:[%s343 + $0x5c] sm:%s335] %v390
                  %v392 = vld [vmem:[%s342 + $0xa0] sm:%s335]
                  %393 = vst [vmem:[%s343 + $0x60] sm:%s335] %v392
                  %v394 = vld [vmem:[%s342 + $0xa4] sm:%s335]
                  %395 = vst [vmem:[%s343 + $0x64] sm:%s335] %v394
                  %v396 = vld [vmem:[%s342 + $0xa8] sm:%s335]
                  %397 = vst [vmem:[%s343 + $0x68] sm:%s335] %v396
                  %v398 = vld [vmem:[%s342 + $0xac] sm:%s335]
                  %399 = vst [vmem:[%s343 + $0x6c] sm:%s335] %v398
                  %v400 = vld [vmem:[%s342 + $0xb0] sm:%s335]
                  %401 = vst [vmem:[%s343 + $0x70] sm:%s335] %v400
                  %v402 = vld [vmem:[%s342 + $0xb4] sm:%s335]
                  %403 = vst [vmem:[%s343 + $0x74] sm:%s335] %v402
                  %v404 = vld [vmem:[%s342 + $0xb8] sm:%s335]
                  %405 = vst [vmem:[%s343 + $0x78] sm:%s335] %v404
                  %v406 = vld [vmem:[%s342 + $0xbc] sm:%s335]
                  %407 = vst [vmem:[%s343 + $0x7c] sm:%s335] %v406
                  %v408 = vld [vmem:[%s342 + $0x100] sm:%s335]
                  %409 = vst [vmem:[%s343 + $0x80] sm:%s335] %v408
                  %v410 = vld [vmem:[%s342 + $0x104] sm:%s335]
                  %411 = vst [vmem:[%s343 + $0x84] sm:%s335] %v410
                  %v412 = vld [vmem:[%s342 + $0x108] sm:%s335]
                  %413 = vst [vmem:[%s343 + $0x88] sm:%s335] %v412
                  %v414 = vld [vmem:[%s342 + $0x10c] sm:%s335]
                  %415 = vst [vmem:[%s343 + $0x8c] sm:%s335] %v414
                  %v416 = vld [vmem:[%s342 + $0x110] sm:%s335]
                  %417 = vst [vmem:[%s343 + $0x90] sm:%s335] %v416
                  %v418 = vld [vmem:[%s342 + $0x114] sm:%s335]
                  %419 = vst [vmem:[%s343 + $0x94] sm:%s335] %v418
                  %v420 = vld [vmem:[%s342 + $0x118] sm:%s335]
                  %421 = vst [vmem:[%s343 + $0x98] sm:%s335] %v420
                  %v422 = vld [vmem:[%s342 + $0x11c] sm:%s335]
                  %423 = vst [vmem:[%s343 + $0x9c] sm:%s335] %v422
                  %v424 = vld [vmem:[%s342 + $0x120] sm:%s335]
                  %425 = vst [vmem:[%s343 + $0xa0] sm:%s335] %v424
                  %v426 = vld [vmem:[%s342 + $0x124] sm:%s335]
                  %427 = vst [vmem:[%s343 + $0xa4] sm:%s335] %v426
                  %v428 = vld [vmem:[%s342 + $0x128] sm:%s335]
                  %429 = vst [vmem:[%s343 + $0xa8] sm:%s335] %v428
                  %v430 = vld [vmem:[%s342 + $0x12c] sm:%s335]
                  %431 = vst [vmem:[%s343 + $0xac] sm:%s335] %v430
                  %v432 = vld [vmem:[%s342 + $0x130] sm:%s335]
                  %433 = vst [vmem:[%s343 + $0xb0] sm:%s335] %v432
                  %v434 = vld [vmem:[%s342 + $0x134] sm:%s335]
                  %435 = vst [vmem:[%s343 + $0xb4] sm:%s335] %v434
                  %v436 = vld [vmem:[%s342 + $0x138] sm:%s335]
                  %437 = vst [vmem:[%s343 + $0xb8] sm:%s335] %v436
                  %v438 = vld [vmem:[%s342 + $0x13c] sm:%s335]
                  %439 = vst [vmem:[%s343 + $0xbc] sm:%s335] %v438
                  %v440 = vld [vmem:[%s342 + $0x180] sm:%s335]
                  %441 = vst [vmem:[%s343 + $0xc0] sm:%s335] %v440
                  %v442 = vld [vmem:[%s342 + $0x184] sm:%s335]
                  %443 = vst [vmem:[%s343 + $0xc4] sm:%s335] %v442
                  %v444 = vld [vmem:[%s342 + $0x188] sm:%s335]
                  %445 = vst [vmem:[%s343 + $0xc8] sm:%s335] %v444
                  %v446 = vld [vmem:[%s342 + $0x18c] sm:%s335]
                  %447 = vst [vmem:[%s343 + $0xcc] sm:%s335] %v446
                  %v448 = vld [vmem:[%s342 + $0x190] sm:%s335]
                  %449 = vst [vmem:[%s343 + $0xd0] sm:%s335] %v448
                  %v450 = vld [vmem:[%s342 + $0x194] sm:%s335]
                  %451 = vst [vmem:[%s343 + $0xd4] sm:%s335] %v450
                  %v452 = vld [vmem:[%s342 + $0x198] sm:%s335]
                  %453 = vst [vmem:[%s343 + $0xd8] sm:%s335] %v452
                  %v454 = vld [vmem:[%s342 + $0x19c] sm:%s335]
                  %455 = vst [vmem:[%s343 + $0xdc] sm:%s335] %v454
                  %v456 = vld [vmem:[%s342 + $0x1a0] sm:%s335]
                  %457 = vst [vmem:[%s343 + $0xe0] sm:%s335] %v456
                  %v458 = vld [vmem:[%s342 + $0x1a4] sm:%s335]
                  %459 = vst [vmem:[%s343 + $0xe4] sm:%s335] %v458
                  %v460 = vld [vmem:[%s342 + $0x1a8] sm:%s335]
                  %461 = vst [vmem:[%s343 + $0xe8] sm:%s335] %v460
                  %v462 = vld [vmem:[%s342 + $0x1ac] sm:%s335]
                  %463 = vst [vmem:[%s343 + $0xec] sm:%s335] %v462
                  %v464 = vld [vmem:[%s342 + $0x1b0] sm:%s335]
                  %465 = vst [vmem:[%s343 + $0xf0] sm:%s335] %v464
                  %v466 = vld [vmem:[%s342 + $0x1b4] sm:%s335]
                  %467 = vst [vmem:[%s343 + $0xf4] sm:%s335] %v466
                  %v468 = vld [vmem:[%s342 + $0x1b8] sm:%s335]
                  %469 = vst [vmem:[%s343 + $0xf8] sm:%s335] %v468
                  %v470 = vld [vmem:[%s342 + $0x1bc] sm:%s335]
                  %471 = vst [vmem:[%s343 + $0xfc] sm:%s335] %v470
                $region67: #{raw_coefficient_net_v0.1} parent=54 // loop_footer
                  %s341 = sadd.s32 1, %s337
                $region68: #{raw_coefficient_net_v0.1} parent=54 // loop_footer_branch
                  %336 = sbr.rel target = $region64
                $region69: #{raw_coefficient_net_v0.1} parent=54 // loop_exit
                  _
              $region55: #{raw_coefficient_net_v0.1} parent=39 // pred_fallthru
                _
            $region40: #{raw_coefficient_net_v0.1} parent=35 // pred_fallthru
              _
            // Predicated region
            $region41: #{raw_coefficient_net_v0.1} parent=35 // pred_check
              _
            $region42: #{raw_coefficient_net_v0.1} parent=35 // pred_check_branch
              %185 = sbr.rel (0) target = $region44
            $region43: #{raw_coefficient_net_v0.1} parent=35 // pred_region
              %s187 = ssub.s32 16, 1
              loop: start=0, step=1, limit=1
              $region45: #{raw_coefficient_net_v0.1} parent=43 // loop_pre_header
                _
              $region46: #{raw_coefficient_net_v0.1} parent=43 // loop_header
                %s189 = sphi 0, %s193
                %p190 = scmp.ge.s32.totalorder %s189, 1
                %s194 = sphi %s179, %s179
                %s195 = sphi %s173, %s173
              $region47: #{raw_coefficient_net_v0.1} parent=43 // loop_header_branch
                %192 = sbr.rel (%p190) target = $region51
              $region48: #{raw_coefficient_net_v0.1} parent=43 // loop_body
                %v196 = vld [vmem:[%s194] sm:%s187]
                %197 = vst [vmem:[%s195] sm:%s187] %v196
                %v198 = vld [vmem:[%s194 + $0x4] sm:%s187]
                %199 = vst [vmem:[%s195 + $0x4] sm:%s187] %v198
                %v200 = vld [vmem:[%s194 + $0x8] sm:%s187]
                %201 = vst [vmem:[%s195 + $0x8] sm:%s187] %v200
                %v202 = vld [vmem:[%s194 + $0xc] sm:%s187]
                %203 = vst [vmem:[%s195 + $0xc] sm:%s187] %v202
                %v204 = vld [vmem:[%s194 + $0x10] sm:%s187]
                %205 = vst [vmem:[%s195 + $0x10] sm:%s187] %v204
                %v206 = vld [vmem:[%s194 + $0x14] sm:%s187]
                %207 = vst [vmem:[%s195 + $0x14] sm:%s187] %v206
                %v208 = vld [vmem:[%s194 + $0x18] sm:%s187]
                %209 = vst [vmem:[%s195 + $0x18] sm:%s187] %v208
                %v210 = vld [vmem:[%s194 + $0x1c] sm:%s187]
                %211 = vst [vmem:[%s195 + $0x1c] sm:%s187] %v210
                %v212 = vld [vmem:[%s194 + $0x20] sm:%s187]
                %213 = vst [vmem:[%s195 + $0x20] sm:%s187] %v212
                %v214 = vld [vmem:[%s194 + $0x24] sm:%s187]
                %215 = vst [vmem:[%s195 + $0x24] sm:%s187] %v214
                %v216 = vld [vmem:[%s194 + $0x28] sm:%s187]
                %217 = vst [vmem:[%s195 + $0x28] sm:%s187] %v216
                %v218 = vld [vmem:[%s194 + $0x2c] sm:%s187]
                %219 = vst [vmem:[%s195 + $0x2c] sm:%s187] %v218
                %v220 = vld [vmem:[%s194 + $0x30] sm:%s187]
                %221 = vst [vmem:[%s195 + $0x30] sm:%s187] %v220
                %v222 = vld [vmem:[%s194 + $0x34] sm:%s187]
                %223 = vst [vmem:[%s195 + $0x34] sm:%s187] %v222
                %v224 = vld [vmem:[%s194 + $0x38] sm:%s187]
                %225 = vst [vmem:[%s195 + $0x38] sm:%s187] %v224
                %v226 = vld [vmem:[%s194 + $0x3c] sm:%s187]
                %227 = vst [vmem:[%s195 + $0x3c] sm:%s187] %v226
                %v228 = vld [vmem:[%s194 + $0x80] sm:%s187]
                %229 = vst [vmem:[%s195 + $0x40] sm:%s187] %v228
                %v230 = vld [vmem:[%s194 + $0x84] sm:%s187]
                %231 = vst [vmem:[%s195 + $0x44] sm:%s187] %v230
                %v232 = vld [vmem:[%s194 + $0x88] sm:%s187]
                %233 = vst [vmem:[%s195 + $0x48] sm:%s187] %v232
                %v234 = vld [vmem:[%s194 + $0x8c] sm:%s187]
                %235 = vst [vmem:[%s195 + $0x4c] sm:%s187] %v234
                %v236 = vld [vmem:[%s194 + $0x90] sm:%s187]
                %237 = vst [vmem:[%s195 + $0x50] sm:%s187] %v236
                %v238 = vld [vmem:[%s194 + $0x94] sm:%s187]
                %239 = vst [vmem:[%s195 + $0x54] sm:%s187] %v238
                %v240 = vld [vmem:[%s194 + $0x98] sm:%s187]
                %241 = vst [vmem:[%s195 + $0x58] sm:%s187] %v240
                %v242 = vld [vmem:[%s194 + $0x9c] sm:%s187]
                %243 = vst [vmem:[%s195 + $0x5c] sm:%s187] %v242
                %v244 = vld [vmem:[%s194 + $0xa0] sm:%s187]
                %245 = vst [vmem:[%s195 + $0x60] sm:%s187] %v244
                %v246 = vld [vmem:[%s194 + $0xa4] sm:%s187]
                %247 = vst [vmem:[%s195 + $0x64] sm:%s187] %v246
                %v248 = vld [vmem:[%s194 + $0xa8] sm:%s187]
                %249 = vst [vmem:[%s195 + $0x68] sm:%s187] %v248
                %v250 = vld [vmem:[%s194 + $0xac] sm:%s187]
                %251 = vst [vmem:[%s195 + $0x6c] sm:%s187] %v250
                %v252 = vld [vmem:[%s194 + $0xb0] sm:%s187]
                %253 = vst [vmem:[%s195 + $0x70] sm:%s187] %v252
                %v254 = vld [vmem:[%s194 + $0xb4] sm:%s187]
                %255 = vst [vmem:[%s195 + $0x74] sm:%s187] %v254
                %v256 = vld [vmem:[%s194 + $0xb8] sm:%s187]
                %257 = vst [vmem:[%s195 + $0x78] sm:%s187] %v256
                %v258 = vld [vmem:[%s194 + $0xbc] sm:%s187]
                %259 = vst [vmem:[%s195 + $0x7c] sm:%s187] %v258
                %v260 = vld [vmem:[%s194 + $0x100] sm:%s187]
                %261 = vst [vmem:[%s195 + $0x80] sm:%s187] %v260
                %v262 = vld [vmem:[%s194 + $0x104] sm:%s187]
                %263 = vst [vmem:[%s195 + $0x84] sm:%s187] %v262
                %v264 = vld [vmem:[%s194 + $0x108] sm:%s187]
                %265 = vst [vmem:[%s195 + $0x88] sm:%s187] %v264
                %v266 = vld [vmem:[%s194 + $0x10c] sm:%s187]
                %267 = vst [vmem:[%s195 + $0x8c] sm:%s187] %v266
                %v268 = vld [vmem:[%s194 + $0x110] sm:%s187]
                %269 = vst [vmem:[%s195 + $0x90] sm:%s187] %v268
                %v270 = vld [vmem:[%s194 + $0x114] sm:%s187]
                %271 = vst [vmem:[%s195 + $0x94] sm:%s187] %v270
                %v272 = vld [vmem:[%s194 + $0x118] sm:%s187]
                %273 = vst [vmem:[%s195 + $0x98] sm:%s187] %v272
                %v274 = vld [vmem:[%s194 + $0x11c] sm:%s187]
                %275 = vst [vmem:[%s195 + $0x9c] sm:%s187] %v274
                %v276 = vld [vmem:[%s194 + $0x120] sm:%s187]
                %277 = vst [vmem:[%s195 + $0xa0] sm:%s187] %v276
                %v278 = vld [vmem:[%s194 + $0x124] sm:%s187]
                %279 = vst [vmem:[%s195 + $0xa4] sm:%s187] %v278
                %v280 = vld [vmem:[%s194 + $0x128] sm:%s187]
                %281 = vst [vmem:[%s195 + $0xa8] sm:%s187] %v280
                %v282 = vld [vmem:[%s194 + $0x12c] sm:%s187]
                %283 = vst [vmem:[%s195 + $0xac] sm:%s187] %v282
                %v284 = vld [vmem:[%s194 + $0x130] sm:%s187]
                %285 = vst [vmem:[%s195 + $0xb0] sm:%s187] %v284
                %v286 = vld [vmem:[%s194 + $0x134] sm:%s187]
                %287 = vst [vmem:[%s195 + $0xb4] sm:%s187] %v286
                %v288 = vld [vmem:[%s194 + $0x138] sm:%s187]
                %289 = vst [vmem:[%s195 + $0xb8] sm:%s187] %v288
                %v290 = vld [vmem:[%s194 + $0x13c] sm:%s187]
                %291 = vst [vmem:[%s195 + $0xbc] sm:%s187] %v290
                %v292 = vld [vmem:[%s194 + $0x180] sm:%s187]
                %293 = vst [vmem:[%s195 + $0xc0] sm:%s187] %v292
                %v294 = vld [vmem:[%s194 + $0x184] sm:%s187]
                %295 = vst [vmem:[%s195 + $0xc4] sm:%s187] %v294
                %v296 = vld [vmem:[%s194 + $0x188] sm:%s187]
                %297 = vst [vmem:[%s195 + $0xc8] sm:%s187] %v296
                %v298 = vld [vmem:[%s194 + $0x18c] sm:%s187]
                %299 = vst [vmem:[%s195 + $0xcc] sm:%s187] %v298
                %v300 = vld [vmem:[%s194 + $0x190] sm:%s187]
                %301 = vst [vmem:[%s195 + $0xd0] sm:%s187] %v300
                %v302 = vld [vmem:[%s194 + $0x194] sm:%s187]
                %303 = vst [vmem:[%s195 + $0xd4] sm:%s187] %v302
                %v304 = vld [vmem:[%s194 + $0x198] sm:%s187]
                %305 = vst [vmem:[%s195 + $0xd8] sm:%s187] %v304
                %v306 = vld [vmem:[%s194 + $0x19c] sm:%s187]
                %307 = vst [vmem:[%s195 + $0xdc] sm:%s187] %v306
                %v308 = vld [vmem:[%s194 + $0x1a0] sm:%s187]
                %309 = vst [vmem:[%s195 + $0xe0] sm:%s187] %v308
                %v310 = vld [vmem:[%s194 + $0x1a4] sm:%s187]
                %311 = vst [vmem:[%s195 + $0xe4] sm:%s187] %v310
                %v312 = vld [vmem:[%s194 + $0x1a8] sm:%s187]
                %313 = vst [vmem:[%s195 + $0xe8] sm:%s187] %v312
                %v314 = vld [vmem:[%s194 + $0x1ac] sm:%s187]
                %315 = vst [vmem:[%s195 + $0xec] sm:%s187] %v314
                %v316 = vld [vmem:[%s194 + $0x1b0] sm:%s187]
                %317 = vst [vmem:[%s195 + $0xf0] sm:%s187] %v316
                %v318 = vld [vmem:[%s194 + $0x1b4] sm:%s187]
                %319 = vst [vmem:[%s195 + $0xf4] sm:%s187] %v318
                %v320 = vld [vmem:[%s194 + $0x1b8] sm:%s187]
                %321 = vst [vmem:[%s195 + $0xf8] sm:%s187] %v320
                %v322 = vld [vmem:[%s194 + $0x1bc] sm:%s187]
                %323 = vst [vmem:[%s195 + $0xfc] sm:%s187] %v322
              $region49: #{raw_coefficient_net_v0.1} parent=43 // loop_footer
                %s193 = sadd.s32 1, %s189
              $region50: #{raw_coefficient_net_v0.1} parent=43 // loop_footer_branch
                %188 = sbr.rel target = $region46
              $region51: #{raw_coefficient_net_v0.1} parent=43 // loop_exit
                _
            $region44: #{raw_coefficient_net_v0.1} parent=35 // pred_fallthru
              _
          $region36: #{raw_coefficient_net_v0.1} parent=31 // pred_fallthru
            _
          %472 = vnop
        $region32: #{raw_coefficient_net_v0.1} parent=27 // pred_fallthru
          _
      $region28: #{raw_coefficient_net_v0.1} parent=5 // pred_fallthru
        _
      %p473 = scmp.le.s32.totalorder 1, %s10
      %p474 = scmp.lt.s32.totalorder %s10, 5
      %p475 = pnand %p473, %p474
      %p476 = pneg %p475
      // Predicated region
      $region70: #{raw_coefficient_net_v0.1} parent=5 // pred_check
        _
      $region71: #{raw_coefficient_net_v0.1} parent=5 // pred_check_branch
        %478 = sbr.rel (%p475) target = $region73
      $region72: #{raw_coefficient_net_v0.1} parent=5 // pred_region
        %s479 = ssub.s32 %s10, 1
        %s480 = sand.u32 %s37, 1
        %s481 = sand.u32 %s37, 1
        %s482 = smul.addr %s481, 256
        %s483 = scalar_lea.vmem [#allocation3], %s482
        // Predicated region
        $region74: #{raw_coefficient_net_v0.1} parent=72 // pred_check
          %p484 = pneg %p50
        $region75: #{raw_coefficient_net_v0.1} parent=72 // pred_check_branch
          %486 = sbr.rel (%p484) target = $region77
        $region76: #{raw_coefficient_net_v0.1} parent=72 // pred_region
          _
        $region77: #{raw_coefficient_net_v0.1} parent=72 // pred_fallthru
          _
        %s487 = sand.u32 %s37, 1
        %s488 = sand.u32 %s37, 1
        %s489 = smul.addr %s488, 256
        %s490 = scalar_lea.vmem [#allocation3], %s489
        %p491 = pneg %p50
        %p492 = pneg %p47
        %p493 = pneg %p71
        %p494 = pneg %p68
        %p495 = pneg %p92
        %p496 = pneg %p89
        %p497 = pneg %p113
        %p498 = pneg %p110
        %p499 = pneg %p139
        %p500 = pneg %p136
        %p501 = scmp.lt.s32.totalorder %s19, 1
        %s502 = scalar_select %p501, %s19, 1
        %s503 = smul.addr %s502, 4
        %s504 = scalar_lea.vmem %s4, %s503
        %s505 = smul.u32 2, %s19
        %s506 = smul.u32 16, %s20
        %p507 = scmp.lt.s32.totalorder %s19, 1
        %s508 = scalar_select %p507, %s19, 1
        %s509 = smul.addr %s508, 4
        %s510 = scalar_lea.vmem %s4, %s509
        %p512 = scmp.eq.s32.totalorder %s20, 0
        // Predicated region
        $region78: #{raw_coefficient_net_v0.1} parent=72 // pred_check
          %p513 = pneg %p512
        $region79: #{raw_coefficient_net_v0.1} parent=72 // pred_check_branch
          %515 = sbr.rel (%p513) target = $region81
        $region80: #{raw_coefficient_net_v0.1} parent=72 // pred_region
          %516 = vst [vmem:[#allocation2] sm:$0xf] -inf
        $region81: #{raw_coefficient_net_v0.1} parent=72 // pred_fallthru
          _
        %v517 = vld [vmem:[%s483] sm:$0xf]
        %v518 = vld [vmem:[%s483 + $0x4] sm:$0xf]
        %v519 = vld [vmem:[%s483 + $0x8] sm:$0xf]
        %v520 = vld [vmem:[%s483 + $0xc] sm:$0xf]
        %v521 = vld [vmem:[%s483 + $0x10] sm:$0xf]
        %v522 = vld [vmem:[%s483 + $0x14] sm:$0xf]
        %v523 = vld [vmem:[%s483 + $0x18] sm:$0xf]
        %v524 = vld [vmem:[%s483 + $0x1c] sm:$0xf]
        %v525 = vld [vmem:[%s483 + $0x20] sm:$0xf]
        %v526 = vld [vmem:[%s483 + $0x24] sm:$0xf]
        %v527 = vld [vmem:[%s483 + $0x28] sm:$0xf]
        %v528 = vld [vmem:[%s483 + $0x2c] sm:$0xf]
        %v529 = vld [vmem:[%s483 + $0x30] sm:$0xf]
        %v530 = vld [vmem:[%s483 + $0x34] sm:$0xf]
        %v531 = vld [vmem:[%s483 + $0x38] sm:$0xf]
        %v532 = vld [vmem:[%s483 + $0x3c] sm:$0xf]
        %v533 = vld [vmem:[%s483 + $0x40] sm:$0xf]
        %v534 = vld [vmem:[%s483 + $0x44] sm:$0xf]
        %v535 = vld [vmem:[%s483 + $0x48] sm:$0xf]
        %v536 = vld [vmem:[%s483 + $0x4c] sm:$0xf]
        %v537 = vld [vmem:[%s483 + $0x50] sm:$0xf]
        %v538 = vld [vmem:[%s483 + $0x54] sm:$0xf]
        %v539 = vld [vmem:[%s483 + $0x58] sm:$0xf]
        %v540 = vld [vmem:[%s483 + $0x5c] sm:$0xf]
        %v541 = vld [vmem:[%s483 + $0x60] sm:$0xf]
        %v542 = vld [vmem:[%s483 + $0x64] sm:$0xf]
        %v543 = vld [vmem:[%s483 + $0x68] sm:$0xf]
        %v544 = vld [vmem:[%s483 + $0x6c] sm:$0xf]
        %v545 = vld [vmem:[%s483 + $0x70] sm:$0xf]
        %v546 = vld [vmem:[%s483 + $0x74] sm:$0xf]
        %v547 = vld [vmem:[%s483 + $0x78] sm:$0xf]
        %v548 = vld [vmem:[%s483 + $0x7c] sm:$0xf]
        %v549 = vld [vmem:[%s483 + $0x80] sm:$0xf]
        %v550 = vld [vmem:[%s483 + $0x84] sm:$0xf]
        %v551 = vld [vmem:[%s483 + $0x88] sm:$0xf]
        %v552 = vld [vmem:[%s483 + $0x8c] sm:$0xf]
        %v553 = vld [vmem:[%s483 + $0x90] sm:$0xf]
        %v554 = vld [vmem:[%s483 + $0x94] sm:$0xf]
        %v555 = vld [vmem:[%s483 + $0x98] sm:$0xf]
        %v556 = vld [vmem:[%s483 + $0x9c] sm:$0xf]
        %v557 = vld [vmem:[%s483 + $0xa0] sm:$0xf]
        %v558 = vld [vmem:[%s483 + $0xa4] sm:$0xf]
        %v559 = vld [vmem:[%s483 + $0xa8] sm:$0xf]
        %v560 = vld [vmem:[%s483 + $0xac] sm:$0xf]
        %v561 = vld [vmem:[%s483 + $0xb0] sm:$0xf]
        %v562 = vld [vmem:[%s483 + $0xb4] sm:$0xf]
        %v563 = vld [vmem:[%s483 + $0xb8] sm:$0xf]
        %v564 = vld [vmem:[%s483 + $0xbc] sm:$0xf]
        %v565 = vld [vmem:[%s483 + $0xc0] sm:$0xf]
        %v566 = vld [vmem:[%s483 + $0xc4] sm:$0xf]
        %v567 = vld [vmem:[%s483 + $0xc8] sm:$0xf]
        %v568 = vld [vmem:[%s483 + $0xcc] sm:$0xf]
        %v569 = vld [vmem:[%s483 + $0xd0] sm:$0xf]
        %v570 = vld [vmem:[%s483 + $0xd4] sm:$0xf]
        %v571 = vld [vmem:[%s483 + $0xd8] sm:$0xf]
        %v572 = vld [vmem:[%s483 + $0xdc] sm:$0xf]
        %v573 = vld [vmem:[%s483 + $0xe0] sm:$0xf]
        %v574 = vld [vmem:[%s483 + $0xe4] sm:$0xf]
        %v575 = vld [vmem:[%s483 + $0xe8] sm:$0xf]
        %v576 = vld [vmem:[%s483 + $0xec] sm:$0xf]
        %v577 = vld [vmem:[%s483 + $0xf0] sm:$0xf]
        %v578 = vld [vmem:[%s483 + $0xf4] sm:$0xf]
        %v579 = vld [vmem:[%s483 + $0xf8] sm:$0xf]
        %v580 = vld [vmem:[%s483 + $0xfc] sm:$0xf]
        %v581 = vld [vmem:[%s1] sm:$0xf]
        %v582 = vld [vmem:[%s3] sm:$0x1]
        %v584 = vlaneseq
        %v585 = vshrl.u32 %v584, 7
        %v586 = vsub.s32 0, %v585
        %v587 = vrot.slane %v582, %v586
        %v653 = vunpack.c.l.b16 %v517
        %v654 = vunpack.c.l.b16 %v518
        %v655 = vunpack.c.l.b16 %v519
        %v656 = vunpack.c.l.b16 %v520
        %v657 = vunpack.c.l.b16 %v521
        %v658 = vunpack.c.l.b16 %v522
        %v659 = vunpack.c.l.b16 %v523
        %v660 = vunpack.c.l.b16 %v524
        %v661 = vunpack.c.l.b16 %v525
        %v662 = vunpack.c.l.b16 %v526
        %v663 = vunpack.c.l.b16 %v527
        %v664 = vunpack.c.l.b16 %v528
        %v665 = vunpack.c.l.b16 %v529
        %v666 = vunpack.c.l.b16 %v530
        %v667 = vunpack.c.l.b16 %v531
        %v668 = vunpack.c.l.b16 %v532
        %v669 = vunpack.c.l.b16 %v533
        %v670 = vunpack.c.l.b16 %v534
        %v671 = vunpack.c.l.b16 %v535
        %v672 = vunpack.c.l.b16 %v536
        %v673 = vunpack.c.l.b16 %v537
        %v674 = vunpack.c.l.b16 %v538
        %v675 = vunpack.c.l.b16 %v539
        %v676 = vunpack.c.l.b16 %v540
        %v677 = vunpack.c.l.b16 %v541
        %v678 = vunpack.c.l.b16 %v542
        %v679 = vunpack.c.l.b16 %v543
        %v680 = vunpack.c.l.b16 %v544
        %v681 = vunpack.c.l.b16 %v545
        %v682 = vunpack.c.l.b16 %v546
        %v683 = vunpack.c.l.b16 %v547
        %v684 = vunpack.c.l.b16 %v548
        %v685 = vunpack.c.l.b16 %v549
        %v686 = vunpack.c.l.b16 %v550
        %v687 = vunpack.c.l.b16 %v551
        %v688 = vunpack.c.l.b16 %v552
        %v689 = vunpack.c.l.b16 %v553
        %v690 = vunpack.c.l.b16 %v554
        %v691 = vunpack.c.l.b16 %v555
        %v692 = vunpack.c.l.b16 %v556
        %v693 = vunpack.c.l.b16 %v557
        %v694 = vunpack.c.l.b16 %v558
        %v695 = vunpack.c.l.b16 %v559
        %v696 = vunpack.c.l.b16 %v560
        %v697 = vunpack.c.l.b16 %v561
        %v698 = vunpack.c.l.b16 %v562
        %v699 = vunpack.c.l.b16 %v563
        %v700 = vunpack.c.l.b16 %v564
        %v701 = vunpack.c.l.b16 %v565
        %v702 = vunpack.c.l.b16 %v566
        %v703 = vunpack.c.l.b16 %v567
        %v704 = vunpack.c.l.b16 %v568
        %v705 = vunpack.c.l.b16 %v569
        %v706 = vunpack.c.l.b16 %v570
        %v707 = vunpack.c.l.b16 %v571
        %v708 = vunpack.c.l.b16 %v572
        %v709 = vunpack.c.l.b16 %v573
        %v710 = vunpack.c.l.b16 %v574
        %v711 = vunpack.c.l.b16 %v575
        %v712 = vunpack.c.l.b16 %v576
        %v713 = vunpack.c.l.b16 %v577
        %v714 = vunpack.c.l.b16 %v578
        %v715 = vunpack.c.l.b16 %v579
        %v716 = vunpack.c.l.b16 %v580
        %v717 = vpack.c.b16 %v654, %v653
        %v718 = vpack.c.b16 %v656, %v655
        %v719 = vpack.c.b16 %v658, %v657
        %v720 = vpack.c.b16 %v660, %v659
        %v721 = vpack.c.b16 %v662, %v661
        %v722 = vpack.c.b16 %v664, %v663
        %v723 = vpack.c.b16 %v666, %v665
        %v724 = vpack.c.b16 %v668, %v667
        %v725 = vpack.c.b16 %v670, %v669
        %v726 = vpack.c.b16 %v672, %v671
        %v727 = vpack.c.b16 %v674, %v673
        %v728 = vpack.c.b16 %v676, %v675
        %v729 = vpack.c.b16 %v678, %v677
        %v730 = vpack.c.b16 %v680, %v679
        %v731 = vpack.c.b16 %v682, %v681
        %v732 = vpack.c.b16 %v684, %v683
        %v733 = vpack.c.b16 %v686, %v685
        %v734 = vpack.c.b16 %v688, %v687
        %v735 = vpack.c.b16 %v690, %v689
        %v736 = vpack.c.b16 %v692, %v691
        %v737 = vpack.c.b16 %v694, %v693
        %v738 = vpack.c.b16 %v696, %v695
        %v739 = vpack.c.b16 %v698, %v697
        %v740 = vpack.c.b16 %v700, %v699
        %v741 = vpack.c.b16 %v702, %v701
        %v742 = vpack.c.b16 %v704, %v703
        %v743 = vpack.c.b16 %v706, %v705
        %v744 = vpack.c.b16 %v708, %v707
        %v745 = vpack.c.b16 %v710, %v709
        %v746 = vpack.c.b16 %v712, %v711
        %v747 = vpack.c.b16 %v714, %v713
        %v748 = vpack.c.b16 %v716, %v715
        %vm749 = vcmask 64512
        %v751 = vsel %vm749, %v717, 0
        %v754 = vsel %vm749, %v718, 0
        %v757 = vsel %vm749, %v719, 0
        %v760 = vsel %vm749, %v720, 0
        %v763 = vsel %vm749, %v721, 0
        %v766 = vsel %vm749, %v722, 0
        %v769 = vsel %vm749, %v723, 0
        %v772 = vsel %vm749, %v724, 0
        %v775 = vsel %vm749, %v725, 0
        %v778 = vsel %vm749, %v726, 0
        %v781 = vsel %vm749, %v727, 0
        %v784 = vsel %vm749, %v728, 0
        %v787 = vsel %vm749, %v729, 0
        %v790 = vsel %vm749, %v730, 0
        %v793 = vsel %vm749, %v731, 0
        %v796 = vsel %vm749, %v732, 0
        %v799 = vsel %vm749, %v733, 0
        %v802 = vsel %vm749, %v734, 0
        %v805 = vsel %vm749, %v735, 0
        %v808 = vsel %vm749, %v736, 0
        %v811 = vsel %vm749, %v737, 0
        %v814 = vsel %vm749, %v738, 0
        %v817 = vsel %vm749, %v739, 0
        %v820 = vsel %vm749, %v740, 0
        %v823 = vsel %vm749, %v741, 0
        %v826 = vsel %vm749, %v742, 0
        %v829 = vsel %vm749, %v743, 0
        %v832 = vsel %vm749, %v744, 0
        %v835 = vsel %vm749, %v745, 0
        %v838 = vsel %vm749, %v746, 0
        %v841 = vsel %vm749, %v747, 0
        %v844 = vsel %vm749, %v748, 0
        %vm846 = vcmask 1043456
        %v848 = vsel %vm846, %v581, 0
        %850 = vmatprep.subr.bf16.mxu0 0
        %851 = vmatpush1.bf16.msra.mxu0 0
        %852 = vmatprep.subr.bf16.mxu0 0
        %853 = vmatpush1.bf16.msra.mxu0 0
        %854 = vmatprep.subr.bf16.mxu0 0
        %855 = vmatpush1.bf16.msra.mxu0 0
        %856 = vmatprep.subr.bf16.mxu0 0
        %857 = vmatpush1.bf16.msra.mxu0 0
        %858 = vmatprep.subr.bf16.mxu0 0
        %859 = vmatpush1.bf16.msra.mxu0 0
        %860 = vmatprep.subr.bf16.mxu0 0
        %861 = vmatpush1.bf16.msra.mxu0 0
        %862 = vmatprep.subr.bf16.mxu0 0
        %863 = vmatpush1.bf16.msra.mxu0 0
        %864 = vmatprep.subr.bf16.mxu0 0
        %865 = vmatpush1.bf16.msra.mxu0 %v848
        %866 = vmatprep.subr.bf16.mxu0 0
        %867 = vmatpush2.bf16.msra.mxu0 0
        %868 = vmatprep.subr.bf16.mxu0 0
        %869 = vmatpush2.bf16.msra.mxu0 0
        %870 = vmatprep.subr.bf16.mxu0 0
        %871 = vmatpush2.bf16.msra.mxu0 0
        %872 = vmatprep.subr.bf16.mxu0 0
        %873 = vmatpush2.bf16.msra.mxu0 0
        %874 = vmatprep.subr.bf16.mxu0 0
        %875 = vmatpush2.bf16.msra.mxu0 0
        %876 = vmatprep.subr.bf16.mxu0 0
        %877 = vmatpush2.bf16.msra.mxu0 0
        %878 = vmatprep.subr.bf16.mxu0 0
        %879 = vmatpush2.bf16.msra.mxu0 0
        %880 = vmatprep.subr.bf16.mxu0 0
        %881 = vmatpush2.bf16.msra.mxu0 0
        %882 = vmatprep.mubr.bf16.mxu0 0
        %883 = vmatmul.mubr.bf16.gmra.mxu0 %v751
        %v884 = vpop.f32.mrf.mxu0
        %v885 = vadd.f32 %v587, %v884
        %v886 = vpop.f32.mrf.mxu0
        %v887 = vpop.f32.mrf.mxu0
        %v888 = vadd.f32 %v587, %v887
        %v889 = vpop.f32.mrf.mxu0
        %890 = vmatprep.mubr.bf16.mxu0 0
        %891 = vmatmul.mubr.bf16.gmra.mxu0 %v754
        %v892 = vpop.f32.mrf.mxu0
        %v893 = vadd.f32 %v587, %v892
        %v894 = vpop.f32.mrf.mxu0
        %v895 = vpop.f32.mrf.mxu0
        %v896 = vadd.f32 %v587, %v895
        %v897 = vpop.f32.mrf.mxu0
        %898 = vmatprep.mubr.bf16.mxu0 0
        %899 = vmatmul.mubr.bf16.gmra.mxu0 %v757
        %v900 = vpop.f32.mrf.mxu0
        %v901 = vadd.f32 %v587, %v900
        %v902 = vpop.f32.mrf.mxu0
        %v903 = vpop.f32.mrf.mxu0
        %v904 = vadd.f32 %v587, %v903
        %v905 = vpop.f32.mrf.mxu0
        %906 = vmatprep.mubr.bf16.mxu0 0
        %907 = vmatmul.mubr.bf16.gmra.mxu0 %v760
        %v908 = vpop.f32.mrf.mxu0
        %v909 = vadd.f32 %v587, %v908
        %v910 = vpop.f32.mrf.mxu0
        %v911 = vpop.f32.mrf.mxu0
        %v912 = vadd.f32 %v587, %v911
        %v913 = vpop.f32.mrf.mxu0
        %914 = vmatprep.mubr.bf16.mxu0 0
        %915 = vmatmul.mubr.bf16.gmra.mxu0 %v763
        %v916 = vpop.f32.mrf.mxu0
        %v917 = vadd.f32 %v587, %v916
        %v918 = vpop.f32.mrf.mxu0
        %v919 = vpop.f32.mrf.mxu0
        %v920 = vadd.f32 %v587, %v919
        %v921 = vpop.f32.mrf.mxu0
        %922 = vmatprep.mubr.bf16.mxu0 0
        %923 = vmatmul.mubr.bf16.gmra.mxu0 %v766
        %v924 = vpop.f32.mrf.mxu0
        %v925 = vadd.f32 %v587, %v924
        %v926 = vpop.f32.mrf.mxu0
        %v927 = vpop.f32.mrf.mxu0
        %v928 = vadd.f32 %v587, %v927
        %v929 = vpop.f32.mrf.mxu0
        %930 = vmatprep.mubr.bf16.mxu0 0
        %931 = vmatmul.mubr.bf16.gmra.mxu0 %v769
        %v932 = vpop.f32.mrf.mxu0
        %v933 = vadd.f32 %v587, %v932
        %v934 = vpop.f32.mrf.mxu0
        %v935 = vpop.f32.mrf.mxu0
        %v936 = vadd.f32 %v587, %v935
        %v937 = vpop.f32.mrf.mxu0
        %938 = vmatprep.mubr.bf16.mxu0 0
        %939 = vmatmul.mubr.bf16.gmra.mxu0 %v772
        %v940 = vpop.f32.mrf.mxu0
        %v941 = vadd.f32 %v587, %v940
        %v942 = vpop.f32.mrf.mxu0
        %v943 = vpop.f32.mrf.mxu0
        %v944 = vadd.f32 %v587, %v943
        %v945 = vpop.f32.mrf.mxu0
        %946 = vmatprep.mubr.bf16.mxu0 0
        %947 = vmatmul.mubr.bf16.gmra.mxu0 %v775
        %v948 = vpop.f32.mrf.mxu0
        %v949 = vadd.f32 %v587, %v948
        %v950 = vpop.f32.mrf.mxu0
        %v951 = vpop.f32.mrf.mxu0
        %v952 = vadd.f32 %v587, %v951
        %v953 = vpop.f32.mrf.mxu0
        %954 = vmatprep.mubr.bf16.mxu0 0
        %955 = vmatmul.mubr.bf16.gmra.mxu0 %v778
        %v956 = vpop.f32.mrf.mxu0
        %v957 = vadd.f32 %v587, %v956
        %v958 = vpop.f32.mrf.mxu0
        %v959 = vpop.f32.mrf.mxu0
        %v960 = vadd.f32 %v587, %v959
        %v961 = vpop.f32.mrf.mxu0
        %962 = vmatprep.mubr.bf16.mxu0 0
        %963 = vmatmul.mubr.bf16.gmra.mxu0 %v781
        %v964 = vpop.f32.mrf.mxu0
        %v965 = vadd.f32 %v587, %v964
        %v966 = vpop.f32.mrf.mxu0
        %v967 = vpop.f32.mrf.mxu0
        %v968 = vadd.f32 %v587, %v967
        %v969 = vpop.f32.mrf.mxu0
        %970 = vmatprep.mubr.bf16.mxu0 0
        %971 = vmatmul.mubr.bf16.gmra.mxu0 %v784
        %v972 = vpop.f32.mrf.mxu0
        %v973 = vadd.f32 %v587, %v972
        %v974 = vpop.f32.mrf.mxu0
        %v975 = vpop.f32.mrf.mxu0
        %v976 = vadd.f32 %v587, %v975
        %v977 = vpop.f32.mrf.mxu0
        %978 = vmatprep.mubr.bf16.mxu0 0
        %979 = vmatmul.mubr.bf16.gmra.mxu0 %v787
        %v980 = vpop.f32.mrf.mxu0
        %v981 = vadd.f32 %v587, %v980
        %v982 = vpop.f32.mrf.mxu0
        %v983 = vpop.f32.mrf.mxu0
        %v984 = vadd.f32 %v587, %v983
        %v985 = vpop.f32.mrf.mxu0
        %986 = vmatprep.mubr.bf16.mxu0 0
        %987 = vmatmul.mubr.bf16.gmra.mxu0 %v790
        %v988 = vpop.f32.mrf.mxu0
        %v989 = vadd.f32 %v587, %v988
        %v990 = vpop.f32.mrf.mxu0
        %v991 = vpop.f32.mrf.mxu0
        %v992 = vadd.f32 %v587, %v991
        %v993 = vpop.f32.mrf.mxu0
        %994 = vmatprep.mubr.bf16.mxu0 0
        %995 = vmatmul.mubr.bf16.gmra.mxu0 %v793
        %v996 = vpop.f32.mrf.mxu0
        %v997 = vadd.f32 %v587, %v996
        %v998 = vpop.f32.mrf.mxu0
        %v999 = vpop.f32.mrf.mxu0
        %v1000 = vadd.f32 %v587, %v999
        %v1001 = vpop.f32.mrf.mxu0
        %1002 = vmatprep.mubr.bf16.mxu0 0
        %1003 = vmatmul.mubr.bf16.gmra.mxu0 %v796
        %v1004 = vpop.f32.mrf.mxu0
        %v1005 = vadd.f32 %v587, %v1004
        %v1006 = vpop.f32.mrf.mxu0
        %v1007 = vpop.f32.mrf.mxu0
        %v1008 = vadd.f32 %v587, %v1007
        %v1009 = vpop.f32.mrf.mxu0
        %1010 = vmatprep.mubr.bf16.mxu0 0
        %1011 = vmatmul.mubr.bf16.gmra.mxu0 %v799
        %v1012 = vpop.f32.mrf.mxu0
        %v1013 = vadd.f32 %v587, %v1012
        %v1014 = vpop.f32.mrf.mxu0
        %v1015 = vpop.f32.mrf.mxu0
        %v1016 = vadd.f32 %v587, %v1015
        %v1017 = vpop.f32.mrf.mxu0
        %1018 = vmatprep.mubr.bf16.mxu0 0
        %1019 = vmatmul.mubr.bf16.gmra.mxu0 %v802
        %v1020 = vpop.f32.mrf.mxu0
        %v1021 = vadd.f32 %v587, %v1020
        %v1022 = vpop.f32.mrf.mxu0
        %v1023 = vpop.f32.mrf.mxu0
        %v1024 = vadd.f32 %v587, %v1023
        %v1025 = vpop.f32.mrf.mxu0
        %1026 = vmatprep.mubr.bf16.mxu0 0
        %1027 = vmatmul.mubr.bf16.gmra.mxu0 %v805
        %v1028 = vpop.f32.mrf.mxu0
        %v1029 = vadd.f32 %v587, %v1028
        %v1030 = vpop.f32.mrf.mxu0
        %v1031 = vpop.f32.mrf.mxu0
        %v1032 = vadd.f32 %v587, %v1031
        %v1033 = vpop.f32.mrf.mxu0
        %1034 = vmatprep.mubr.bf16.mxu0 0
        %1035 = vmatmul.mubr.bf16.gmra.mxu0 %v808
        %v1036 = vpop.f32.mrf.mxu0
        %v1037 = vadd.f32 %v587, %v1036
        %v1038 = vpop.f32.mrf.mxu0
        %v1039 = vpop.f32.mrf.mxu0
        %v1040 = vadd.f32 %v587, %v1039
        %v1041 = vpop.f32.mrf.mxu0
        %1042 = vmatprep.mubr.bf16.mxu0 0
        %1043 = vmatmul.mubr.bf16.gmra.mxu0 %v811
        %v1044 = vpop.f32.mrf.mxu0
        %v1045 = vadd.f32 %v587, %v1044
        %v1046 = vpop.f32.mrf.mxu0
        %v1047 = vpop.f32.mrf.mxu0
        %v1048 = vadd.f32 %v587, %v1047
        %v1049 = vpop.f32.mrf.mxu0
        %1050 = vmatprep.mubr.bf16.mxu0 0
        %1051 = vmatmul.mubr.bf16.gmra.mxu0 %v814
        %v1052 = vpop.f32.mrf.mxu0
        %v1053 = vadd.f32 %v587, %v1052
        %v1054 = vpop.f32.mrf.mxu0
        %v1055 = vpop.f32.mrf.mxu0
        %v1056 = vadd.f32 %v587, %v1055
        %v1057 = vpop.f32.mrf.mxu0
        %1058 = vmatprep.mubr.bf16.mxu0 0
        %1059 = vmatmul.mubr.bf16.gmra.mxu0 %v817
        %v1060 = vpop.f32.mrf.mxu0
        %v1061 = vadd.f32 %v587, %v1060
        %v1062 = vpop.f32.mrf.mxu0
        %v1063 = vpop.f32.mrf.mxu0
        %v1064 = vadd.f32 %v587, %v1063
        %v1065 = vpop.f32.mrf.mxu0
        %1066 = vmatprep.mubr.bf16.mxu0 0
        %1067 = vmatmul.mubr.bf16.gmra.mxu0 %v820
        %v1068 = vpop.f32.mrf.mxu0
        %v1069 = vadd.f32 %v587, %v1068
        %v1070 = vpop.f32.mrf.mxu0
        %v1071 = vpop.f32.mrf.mxu0
        %v1072 = vadd.f32 %v587, %v1071
        %v1073 = vpop.f32.mrf.mxu0
        %1074 = vmatprep.mubr.bf16.mxu0 0
        %1075 = vmatmul.mubr.bf16.gmra.mxu0 %v823
        %v1076 = vpop.f32.mrf.mxu0
        %v1077 = vadd.f32 %v587, %v1076
        %v1078 = vpop.f32.mrf.mxu0
        %v1079 = vpop.f32.mrf.mxu0
        %v1080 = vadd.f32 %v587, %v1079
        %v1081 = vpop.f32.mrf.mxu0
        %1082 = vmatprep.mubr.bf16.mxu0 0
        %1083 = vmatmul.mubr.bf16.gmra.mxu0 %v826
        %v1084 = vpop.f32.mrf.mxu0
        %v1085 = vadd.f32 %v587, %v1084
        %v1086 = vpop.f32.mrf.mxu0
        %v1087 = vpop.f32.mrf.mxu0
        %v1088 = vadd.f32 %v587, %v1087
        %v1089 = vpop.f32.mrf.mxu0
        %1090 = vmatprep.mubr.bf16.mxu0 0
        %1091 = vmatmul.mubr.bf16.gmra.mxu0 %v829
        %v1092 = vpop.f32.mrf.mxu0
        %v1093 = vadd.f32 %v587, %v1092
        %v1094 = vpop.f32.mrf.mxu0
        %v1095 = vpop.f32.mrf.mxu0
        %v1096 = vadd.f32 %v587, %v1095
        %v1097 = vpop.f32.mrf.mxu0
        %1098 = vmatprep.mubr.bf16.mxu0 0
        %1099 = vmatmul.mubr.bf16.gmra.mxu0 %v832
        %v1100 = vpop.f32.mrf.mxu0
        %v1101 = vadd.f32 %v587, %v1100
        %v1102 = vpop.f32.mrf.mxu0
        %v1103 = vpop.f32.mrf.mxu0
        %v1104 = vadd.f32 %v587, %v1103
        %v1105 = vpop.f32.mrf.mxu0
        %1106 = vmatprep.mubr.bf16.mxu0 0
        %1107 = vmatmul.mubr.bf16.gmra.mxu0 %v835
        %v1108 = vpop.f32.mrf.mxu0
        %v1109 = vadd.f32 %v587, %v1108
        %v1110 = vpop.f32.mrf.mxu0
        %v1111 = vpop.f32.mrf.mxu0
        %v1112 = vadd.f32 %v587, %v1111
        %v1113 = vpop.f32.mrf.mxu0
        %1114 = vmatprep.mubr.bf16.mxu0 0
        %1115 = vmatmul.mubr.bf16.gmra.mxu0 %v838
        %v1116 = vpop.f32.mrf.mxu0
        %v1117 = vadd.f32 %v587, %v1116
        %v1118 = vpop.f32.mrf.mxu0
        %v1119 = vpop.f32.mrf.mxu0
        %v1120 = vadd.f32 %v587, %v1119
        %v1121 = vpop.f32.mrf.mxu0
        %1122 = vmatprep.mubr.bf16.mxu0 0
        %1123 = vmatmul.mubr.bf16.gmra.mxu0 %v841
        %v1124 = vpop.f32.mrf.mxu0
        %v1125 = vadd.f32 %v587, %v1124
        %v1126 = vpop.f32.mrf.mxu0
        %v1127 = vpop.f32.mrf.mxu0
        %v1128 = vadd.f32 %v587, %v1127
        %v1129 = vpop.f32.mrf.mxu0
        %1130 = vmatprep.mubr.bf16.mxu0 0
        %1131 = vmatmul.mubr.bf16.gmra.mxu0 %v844
        %v1132 = vpop.f32.mrf.mxu0
        %v1133 = vadd.f32 %v587, %v1132
        %v1134 = vpop.f32.mrf.mxu0
        %v1135 = vpop.f32.mrf.mxu0
        %v1136 = vadd.f32 %v587, %v1135
        %v1137 = vpop.f32.mrf.mxu0
        %1138 = vdwg.mxu0
        %v1139 = vmax.f32 %v885, 0.0
        %v1140 = vmax.f32 %v888, 0.0
        %v1141 = vmax.f32 %v893, 0.0
        %v1142 = vmax.f32 %v896, 0.0
        %v1143 = vmax.f32 %v901, 0.0
        %v1144 = vmax.f32 %v904, 0.0
        %v1145 = vmax.f32 %v909, 0.0
        %v1146 = vmax.f32 %v912, 0.0
        %v1147 = vmax.f32 %v917, 0.0
        %v1148 = vmax.f32 %v920, 0.0
        %v1149 = vmax.f32 %v925, 0.0
        %v1150 = vmax.f32 %v928, 0.0
        %v1151 = vmax.f32 %v933, 0.0
        %v1152 = vmax.f32 %v936, 0.0
        %v1153 = vmax.f32 %v941, 0.0
        %v1154 = vmax.f32 %v944, 0.0
        %v1155 = vmax.f32 %v949, 0.0
        %v1156 = vmax.f32 %v952, 0.0
        %v1157 = vmax.f32 %v957, 0.0
        %v1158 = vmax.f32 %v960, 0.0
        %v1159 = vmax.f32 %v965, 0.0
        %v1160 = vmax.f32 %v968, 0.0
        %v1161 = vmax.f32 %v973, 0.0
        %v1162 = vmax.f32 %v976, 0.0
        %v1163 = vmax.f32 %v981, 0.0
        %v1164 = vmax.f32 %v984, 0.0
        %v1165 = vmax.f32 %v989, 0.0
        %v1166 = vmax.f32 %v992, 0.0
        %v1167 = vmax.f32 %v997, 0.0
        %v1168 = vmax.f32 %v1000, 0.0
        %v1169 = vmax.f32 %v1005, 0.0
        %v1170 = vmax.f32 %v1008, 0.0
        %v1171 = vmax.f32 %v1013, 0.0
        %v1172 = vmax.f32 %v1016, 0.0
        %v1173 = vmax.f32 %v1021, 0.0
        %v1174 = vmax.f32 %v1024, 0.0
        %v1175 = vmax.f32 %v1029, 0.0
        %v1176 = vmax.f32 %v1032, 0.0
        %v1177 = vmax.f32 %v1037, 0.0
        %v1178 = vmax.f32 %v1040, 0.0
        %v1179 = vmax.f32 %v1045, 0.0
        %v1180 = vmax.f32 %v1048, 0.0
        %v1181 = vmax.f32 %v1053, 0.0
        %v1182 = vmax.f32 %v1056, 0.0
        %v1183 = vmax.f32 %v1061, 0.0
        %v1184 = vmax.f32 %v1064, 0.0
        %v1185 = vmax.f32 %v1069, 0.0
        %v1186 = vmax.f32 %v1072, 0.0
        %v1187 = vmax.f32 %v1077, 0.0
        %v1188 = vmax.f32 %v1080, 0.0
        %v1189 = vmax.f32 %v1085, 0.0
        %v1190 = vmax.f32 %v1088, 0.0
        %v1191 = vmax.f32 %v1093, 0.0
        %v1192 = vmax.f32 %v1096, 0.0
        %v1193 = vmax.f32 %v1101, 0.0
        %v1194 = vmax.f32 %v1104, 0.0
        %v1195 = vmax.f32 %v1109, 0.0
        %v1196 = vmax.f32 %v1112, 0.0
        %v1197 = vmax.f32 %v1117, 0.0
        %v1198 = vmax.f32 %v1120, 0.0
        %v1199 = vmax.f32 %v1125, 0.0
        %v1200 = vmax.f32 %v1128, 0.0
        %v1201 = vmax.f32 %v1133, 0.0
        %v1202 = vmax.f32 %v1136, 0.0
        %v1203 = vpack.c.bf16 %v1140, %v1139
        %v1204 = vpack.c.bf16 %v1142, %v1141
        %v1205 = vpack.c.bf16 %v1144, %v1143
        %v1206 = vpack.c.bf16 %v1146, %v1145
        %v1207 = vpack.c.bf16 %v1148, %v1147
        %v1208 = vpack.c.bf16 %v1150, %v1149
        %v1209 = vpack.c.bf16 %v1152, %v1151
        %v1210 = vpack.c.bf16 %v1154, %v1153
        %v1211 = vpack.c.bf16 %v1156, %v1155
        %v1212 = vpack.c.bf16 %v1158, %v1157
        %v1213 = vpack.c.bf16 %v1160, %v1159
        %v1214 = vpack.c.bf16 %v1162, %v1161
        %v1215 = vpack.c.bf16 %v1164, %v1163
        %v1216 = vpack.c.bf16 %v1166, %v1165
        %v1217 = vpack.c.bf16 %v1168, %v1167
        %v1218 = vpack.c.bf16 %v1170, %v1169
        %v1219 = vpack.c.bf16 %v1172, %v1171
        %v1220 = vpack.c.bf16 %v1174, %v1173
        %v1221 = vpack.c.bf16 %v1176, %v1175
        %v1222 = vpack.c.bf16 %v1178, %v1177
        %v1223 = vpack.c.bf16 %v1180, %v1179
        %v1224 = vpack.c.bf16 %v1182, %v1181
        %v1225 = vpack.c.bf16 %v1184, %v1183
        %v1226 = vpack.c.bf16 %v1186, %v1185
        %v1227 = vpack.c.bf16 %v1188, %v1187
        %v1228 = vpack.c.bf16 %v1190, %v1189
        %v1229 = vpack.c.bf16 %v1192, %v1191
        %v1230 = vpack.c.bf16 %v1194, %v1193
        %v1231 = vpack.c.bf16 %v1196, %v1195
        %v1232 = vpack.c.bf16 %v1198, %v1197
        %v1233 = vpack.c.bf16 %v1200, %v1199
        %v1234 = vpack.c.bf16 %v1202, %v1201
        %v1235 = vld [vmem:[%s2] sm:$0xf]
        %v1236 = vld [vmem:[%s2 + $0x4] sm:$0xf]
        %v1237 = vld [vmem:[%s2 + $0x8] sm:$0xf]
        %v1238 = vld [vmem:[%s2 + $0xc] sm:$0xf]
        %v1239 = vld [vmem:[%s2 + $0x10] sm:$0xf]
        %v1240 = vld [vmem:[%s2 + $0x14] sm:$0xf]
        %v1241 = vld [vmem:[%s2 + $0x18] sm:$0xf]
        %v1242 = vld [vmem:[%s2 + $0x1c] sm:$0xf]
        %v1243 = vld [vmem:[%s2 + $0x20] sm:$0xf]
        %v1244 = vld [vmem:[%s2 + $0x24] sm:$0xf]
        %v1245 = vld [vmem:[%s2 + $0x28] sm:$0xf]
        %v1246 = vld [vmem:[%s2 + $0x2c] sm:$0xf]
        %v1247 = vld [vmem:[%s2 + $0x30] sm:$0xf]
        %v1248 = vld [vmem:[%s2 + $0x34] sm:$0xf]
        %v1249 = vld [vmem:[%s2 + $0x38] sm:$0xf]
        %v1250 = vld [vmem:[%s2 + $0x3c] sm:$0xf]
        %s1251 = scalar_lea.vmem %s3, 1
        %v1252 = vld [vmem:[%s1251] sm:$0x1]
        %v1254 = vlaneseq
        %v1255 = vshrl.u32 %v1254, 7
        %v1256 = vsub.s32 0, %v1255
        %v1257 = vrot.slane %v1252, %v1256
        %v1275 = vunpack.c.l.b16 %v1235
        %v1276 = vunpack.c.l.b16 %v1236
        %v1277 = vunpack.c.l.b16 %v1237
        %v1278 = vunpack.c.l.b16 %v1238
        %v1279 = vunpack.c.l.b16 %v1239
        %v1280 = vunpack.c.l.b16 %v1240
        %v1281 = vunpack.c.l.b16 %v1241
        %v1282 = vunpack.c.l.b16 %v1242
        %v1283 = vunpack.c.l.b16 %v1243
        %v1284 = vunpack.c.l.b16 %v1244
        %v1285 = vunpack.c.l.b16 %v1245
        %v1286 = vunpack.c.l.b16 %v1246
        %v1287 = vunpack.c.l.b16 %v1247
        %v1288 = vunpack.c.l.b16 %v1248
        %v1289 = vunpack.c.l.b16 %v1249
        %v1290 = vunpack.c.l.b16 %v1250
        %v1291 = vpack.c.b16 %v1276, %v1275
        %v1292 = vpack.c.b16 %v1278, %v1277
        %v1293 = vpack.c.b16 %v1280, %v1279
        %v1294 = vpack.c.b16 %v1282, %v1281
        %v1295 = vpack.c.b16 %v1284, %v1283
        %v1296 = vpack.c.b16 %v1286, %v1285
        %v1297 = vpack.c.b16 %v1288, %v1287
        %v1298 = vpack.c.b16 %v1290, %v1289
        %1307 = vmatprep.subr.bf16.mxu0 0
        %1308 = vmatpush1.bf16.msra.mxu0 %v1298
        %1309 = vmatprep.subr.bf16.mxu0 0
        %1310 = vmatpush1.bf16.msra.mxu0 %v1297
        %1311 = vmatprep.subr.bf16.mxu0 0
        %1312 = vmatpush1.bf16.msra.mxu0 %v1296
        %1313 = vmatprep.subr.bf16.mxu0 0
        %1314 = vmatpush1.bf16.msra.mxu0 %v1295
        %1315 = vmatprep.subr.bf16.mxu0 0
        %1316 = vmatpush1.bf16.msra.mxu0 %v1294
        %1317 = vmatprep.subr.bf16.mxu0 0
        %1318 = vmatpush1.bf16.msra.mxu0 %v1293
        %1319 = vmatprep.subr.bf16.mxu0 0
        %1320 = vmatpush1.bf16.msra.mxu0 %v1292
        %1321 = vmatprep.subr.bf16.mxu0 0
        %1322 = vmatpush1.bf16.msra.mxu0 %v1291
        %1323 = vmatprep.subr.bf16.mxu0 0
        %1324 = vmatpush2.bf16.msra.mxu0 0
        %1325 = vmatprep.subr.bf16.mxu0 0
        %1326 = vmatpush2.bf16.msra.mxu0 0
        %1327 = vmatprep.subr.bf16.mxu0 0
        %1328 = vmatpush2.bf16.msra.mxu0 0
        %1329 = vmatprep.subr.bf16.mxu0 0
        %1330 = vmatpush2.bf16.msra.mxu0 0
        %1331 = vmatprep.subr.bf16.mxu0 0
        %1332 = vmatpush2.bf16.msra.mxu0 0
        %1333 = vmatprep.subr.bf16.mxu0 0
        %1334 = vmatpush2.bf16.msra.mxu0 0
        %1335 = vmatprep.subr.bf16.mxu0 0
        %1336 = vmatpush2.bf16.msra.mxu0 0
        %1337 = vmatprep.subr.bf16.mxu0 0
        %1338 = vmatpush2.bf16.msra.mxu0 0
        %1339 = vmatprep.mubr.bf16.mxu0 0
        %1340 = vmatmul.mubr.bf16.gmra.mxu0 %v1203
        %v1341 = vpop.f32.mrf.mxu0
        %v1342 = vadd.f32 %v1257, %v1341
        %v1343 = vpop.f32.mrf.mxu0
        %v1344 = vpop.f32.mrf.mxu0
        %v1345 = vadd.f32 %v1257, %v1344
        %v1346 = vpop.f32.mrf.mxu0
        %1347 = vmatprep.mubr.bf16.mxu0 0
        %1348 = vmatmul.mubr.bf16.gmra.mxu0 %v1204
        %v1349 = vpop.f32.mrf.mxu0
        %v1350 = vadd.f32 %v1257, %v1349
        %v1351 = vpop.f32.mrf.mxu0
        %v1352 = vpop.f32.mrf.mxu0
        %v1353 = vadd.f32 %v1257, %v1352
        %v1354 = vpop.f32.mrf.mxu0
        %1355 = vmatprep.mubr.bf16.mxu0 0
        %1356 = vmatmul.mubr.bf16.gmra.mxu0 %v1205
        %v1357 = vpop.f32.mrf.mxu0
        %v1358 = vadd.f32 %v1257, %v1357
        %v1359 = vpop.f32.mrf.mxu0
        %v1360 = vpop.f32.mrf.mxu0
        %v1361 = vadd.f32 %v1257, %v1360
        %v1362 = vpop.f32.mrf.mxu0
        %1363 = vmatprep.mubr.bf16.mxu0 0
        %1364 = vmatmul.mubr.bf16.gmra.mxu0 %v1206
        %v1365 = vpop.f32.mrf.mxu0
        %v1366 = vadd.f32 %v1257, %v1365
        %v1367 = vpop.f32.mrf.mxu0
        %v1368 = vpop.f32.mrf.mxu0
        %v1369 = vadd.f32 %v1257, %v1368
        %v1370 = vpop.f32.mrf.mxu0
        %1371 = vmatprep.mubr.bf16.mxu0 0
        %1372 = vmatmul.mubr.bf16.gmra.mxu0 %v1207
        %v1373 = vpop.f32.mrf.mxu0
        %v1374 = vadd.f32 %v1257, %v1373
        %v1375 = vpop.f32.mrf.mxu0
        %v1376 = vpop.f32.mrf.mxu0
        %v1377 = vadd.f32 %v1257, %v1376
        %v1378 = vpop.f32.mrf.mxu0
        %1379 = vmatprep.mubr.bf16.mxu0 0
        %1380 = vmatmul.mubr.bf16.gmra.mxu0 %v1208
        %v1381 = vpop.f32.mrf.mxu0
        %v1382 = vadd.f32 %v1257, %v1381
        %v1383 = vpop.f32.mrf.mxu0
        %v1384 = vpop.f32.mrf.mxu0
        %v1385 = vadd.f32 %v1257, %v1384
        %v1386 = vpop.f32.mrf.mxu0
        %1387 = vmatprep.mubr.bf16.mxu0 0
        %1388 = vmatmul.mubr.bf16.gmra.mxu0 %v1209
        %v1389 = vpop.f32.mrf.mxu0
        %v1390 = vadd.f32 %v1257, %v1389
        %v1391 = vpop.f32.mrf.mxu0
        %v1392 = vpop.f32.mrf.mxu0
        %v1393 = vadd.f32 %v1257, %v1392
        %v1394 = vpop.f32.mrf.mxu0
        %1395 = vmatprep.mubr.bf16.mxu0 0
        %1396 = vmatmul.mubr.bf16.gmra.mxu0 %v1210
        %v1397 = vpop.f32.mrf.mxu0
        %v1398 = vadd.f32 %v1257, %v1397
        %v1399 = vpop.f32.mrf.mxu0
        %v1400 = vpop.f32.mrf.mxu0
        %v1401 = vadd.f32 %v1257, %v1400
        %v1402 = vpop.f32.mrf.mxu0
        %1403 = vmatprep.mubr.bf16.mxu0 0
        %1404 = vmatmul.mubr.bf16.gmra.mxu0 %v1211
        %v1405 = vpop.f32.mrf.mxu0
        %v1406 = vadd.f32 %v1257, %v1405
        %v1407 = vpop.f32.mrf.mxu0
        %v1408 = vpop.f32.mrf.mxu0
        %v1409 = vadd.f32 %v1257, %v1408
        %v1410 = vpop.f32.mrf.mxu0
        %1411 = vmatprep.mubr.bf16.mxu0 0
        %1412 = vmatmul.mubr.bf16.gmra.mxu0 %v1212
        %v1413 = vpop.f32.mrf.mxu0
        %v1414 = vadd.f32 %v1257, %v1413
        %v1415 = vpop.f32.mrf.mxu0
        %v1416 = vpop.f32.mrf.mxu0
        %v1417 = vadd.f32 %v1257, %v1416
        %v1418 = vpop.f32.mrf.mxu0
        %1419 = vmatprep.mubr.bf16.mxu0 0
        %1420 = vmatmul.mubr.bf16.gmra.mxu0 %v1213
        %v1421 = vpop.f32.mrf.mxu0
        %v1422 = vadd.f32 %v1257, %v1421
        %v1423 = vpop.f32.mrf.mxu0
        %v1424 = vpop.f32.mrf.mxu0
        %v1425 = vadd.f32 %v1257, %v1424
        %v1426 = vpop.f32.mrf.mxu0
        %1427 = vmatprep.mubr.bf16.mxu0 0
        %1428 = vmatmul.mubr.bf16.gmra.mxu0 %v1214
        %v1429 = vpop.f32.mrf.mxu0
        %v1430 = vadd.f32 %v1257, %v1429
        %v1431 = vpop.f32.mrf.mxu0
        %v1432 = vpop.f32.mrf.mxu0
        %v1433 = vadd.f32 %v1257, %v1432
        %v1434 = vpop.f32.mrf.mxu0
        %1435 = vmatprep.mubr.bf16.mxu0 0
        %1436 = vmatmul.mubr.bf16.gmra.mxu0 %v1215
        %v1437 = vpop.f32.mrf.mxu0
        %v1438 = vadd.f32 %v1257, %v1437
        %v1439 = vpop.f32.mrf.mxu0
        %v1440 = vpop.f32.mrf.mxu0
        %v1441 = vadd.f32 %v1257, %v1440
        %v1442 = vpop.f32.mrf.mxu0
        %1443 = vmatprep.mubr.bf16.mxu0 0
        %1444 = vmatmul.mubr.bf16.gmra.mxu0 %v1216
        %v1445 = vpop.f32.mrf.mxu0
        %v1446 = vadd.f32 %v1257, %v1445
        %v1447 = vpop.f32.mrf.mxu0
        %v1448 = vpop.f32.mrf.mxu0
        %v1449 = vadd.f32 %v1257, %v1448
        %v1450 = vpop.f32.mrf.mxu0
        %1451 = vmatprep.mubr.bf16.mxu0 0
        %1452 = vmatmul.mubr.bf16.gmra.mxu0 %v1217
        %v1453 = vpop.f32.mrf.mxu0
        %v1454 = vadd.f32 %v1257, %v1453
        %v1455 = vpop.f32.mrf.mxu0
        %v1456 = vpop.f32.mrf.mxu0
        %v1457 = vadd.f32 %v1257, %v1456
        %v1458 = vpop.f32.mrf.mxu0
        %1459 = vmatprep.mubr.bf16.mxu0 0
        %1460 = vmatmul.mubr.bf16.gmra.mxu0 %v1218
        %v1461 = vpop.f32.mrf.mxu0
        %v1462 = vadd.f32 %v1257, %v1461
        %v1463 = vpop.f32.mrf.mxu0
        %v1464 = vpop.f32.mrf.mxu0
        %v1465 = vadd.f32 %v1257, %v1464
        %v1466 = vpop.f32.mrf.mxu0
        %1467 = vmatprep.mubr.bf16.mxu0 0
        %1468 = vmatmul.mubr.bf16.gmra.mxu0 %v1219
        %v1469 = vpop.f32.mrf.mxu0
        %v1470 = vadd.f32 %v1257, %v1469
        %v1471 = vpop.f32.mrf.mxu0
        %v1472 = vpop.f32.mrf.mxu0
        %v1473 = vadd.f32 %v1257, %v1472
        %v1474 = vpop.f32.mrf.mxu0
        %1475 = vmatprep.mubr.bf16.mxu0 0
        %1476 = vmatmul.mubr.bf16.gmra.mxu0 %v1220
        %v1477 = vpop.f32.mrf.mxu0
        %v1478 = vadd.f32 %v1257, %v1477
        %v1479 = vpop.f32.mrf.mxu0
        %v1480 = vpop.f32.mrf.mxu0
        %v1481 = vadd.f32 %v1257, %v1480
        %v1482 = vpop.f32.mrf.mxu0
        %1483 = vmatprep.mubr.bf16.mxu0 0
        %1484 = vmatmul.mubr.bf16.gmra.mxu0 %v1221
        %v1485 = vpop.f32.mrf.mxu0
        %v1486 = vadd.f32 %v1257, %v1485
        %v1487 = vpop.f32.mrf.mxu0
        %v1488 = vpop.f32.mrf.mxu0
        %v1489 = vadd.f32 %v1257, %v1488
        %v1490 = vpop.f32.mrf.mxu0
        %1491 = vmatprep.mubr.bf16.mxu0 0
        %1492 = vmatmul.mubr.bf16.gmra.mxu0 %v1222
        %v1493 = vpop.f32.mrf.mxu0
        %v1494 = vadd.f32 %v1257, %v1493
        %v1495 = vpop.f32.mrf.mxu0
        %v1496 = vpop.f32.mrf.mxu0
        %v1497 = vadd.f32 %v1257, %v1496
        %v1498 = vpop.f32.mrf.mxu0
        %1499 = vmatprep.mubr.bf16.mxu0 0
        %1500 = vmatmul.mubr.bf16.gmra.mxu0 %v1223
        %v1501 = vpop.f32.mrf.mxu0
        %v1502 = vadd.f32 %v1257, %v1501
        %v1503 = vpop.f32.mrf.mxu0
        %v1504 = vpop.f32.mrf.mxu0
        %v1505 = vadd.f32 %v1257, %v1504
        %v1506 = vpop.f32.mrf.mxu0
        %1507 = vmatprep.mubr.bf16.mxu0 0
        %1508 = vmatmul.mubr.bf16.gmra.mxu0 %v1224
        %v1509 = vpop.f32.mrf.mxu0
        %v1510 = vadd.f32 %v1257, %v1509
        %v1511 = vpop.f32.mrf.mxu0
        %v1512 = vpop.f32.mrf.mxu0
        %v1513 = vadd.f32 %v1257, %v1512
        %v1514 = vpop.f32.mrf.mxu0
        %1515 = vmatprep.mubr.bf16.mxu0 0
        %1516 = vmatmul.mubr.bf16.gmra.mxu0 %v1225
        %v1517 = vpop.f32.mrf.mxu0
        %v1518 = vadd.f32 %v1257, %v1517
        %v1519 = vpop.f32.mrf.mxu0
        %v1520 = vpop.f32.mrf.mxu0
        %v1521 = vadd.f32 %v1257, %v1520
        %v1522 = vpop.f32.mrf.mxu0
        %1523 = vmatprep.mubr.bf16.mxu0 0
        %1524 = vmatmul.mubr.bf16.gmra.mxu0 %v1226
        %v1525 = vpop.f32.mrf.mxu0
        %v1526 = vadd.f32 %v1257, %v1525
        %v1527 = vpop.f32.mrf.mxu0
        %v1528 = vpop.f32.mrf.mxu0
        %v1529 = vadd.f32 %v1257, %v1528
        %v1530 = vpop.f32.mrf.mxu0
        %1531 = vmatprep.mubr.bf16.mxu0 0
        %1532 = vmatmul.mubr.bf16.gmra.mxu0 %v1227
        %v1533 = vpop.f32.mrf.mxu0
        %v1534 = vadd.f32 %v1257, %v1533
        %v1535 = vpop.f32.mrf.mxu0
        %v1536 = vpop.f32.mrf.mxu0
        %v1537 = vadd.f32 %v1257, %v1536
        %v1538 = vpop.f32.mrf.mxu0
        %1539 = vmatprep.mubr.bf16.mxu0 0
        %1540 = vmatmul.mubr.bf16.gmra.mxu0 %v1228
        %v1541 = vpop.f32.mrf.mxu0
        %v1542 = vadd.f32 %v1257, %v1541
        %v1543 = vpop.f32.mrf.mxu0
        %v1544 = vpop.f32.mrf.mxu0
        %v1545 = vadd.f32 %v1257, %v1544
        %v1546 = vpop.f32.mrf.mxu0
        %1547 = vmatprep.mubr.bf16.mxu0 0
        %1548 = vmatmul.mubr.bf16.gmra.mxu0 %v1229
        %v1549 = vpop.f32.mrf.mxu0
        %v1550 = vadd.f32 %v1257, %v1549
        %v1551 = vpop.f32.mrf.mxu0
        %v1552 = vpop.f32.mrf.mxu0
        %v1553 = vadd.f32 %v1257, %v1552
        %v1554 = vpop.f32.mrf.mxu0
        %1555 = vmatprep.mubr.bf16.mxu0 0
        %1556 = vmatmul.mubr.bf16.gmra.mxu0 %v1230
        %v1557 = vpop.f32.mrf.mxu0
        %v1558 = vadd.f32 %v1257, %v1557
        %v1559 = vpop.f32.mrf.mxu0
        %v1560 = vpop.f32.mrf.mxu0
        %v1561 = vadd.f32 %v1257, %v1560
        %v1562 = vpop.f32.mrf.mxu0
        %1563 = vmatprep.mubr.bf16.mxu0 0
        %1564 = vmatmul.mubr.bf16.gmra.mxu0 %v1231
        %v1565 = vpop.f32.mrf.mxu0
        %v1566 = vadd.f32 %v1257, %v1565
        %v1567 = vpop.f32.mrf.mxu0
        %v1568 = vpop.f32.mrf.mxu0
        %v1569 = vadd.f32 %v1257, %v1568
        %v1570 = vpop.f32.mrf.mxu0
        %1571 = vmatprep.mubr.bf16.mxu0 0
        %1572 = vmatmul.mubr.bf16.gmra.mxu0 %v1232
        %v1573 = vpop.f32.mrf.mxu0
        %v1574 = vadd.f32 %v1257, %v1573
        %v1575 = vpop.f32.mrf.mxu0
        %v1576 = vpop.f32.mrf.mxu0
        %v1577 = vadd.f32 %v1257, %v1576
        %v1578 = vpop.f32.mrf.mxu0
        %1579 = vmatprep.mubr.bf16.mxu0 0
        %1580 = vmatmul.mubr.bf16.gmra.mxu0 %v1233
        %v1581 = vpop.f32.mrf.mxu0
        %v1582 = vadd.f32 %v1257, %v1581
        %v1583 = vpop.f32.mrf.mxu0
        %v1584 = vpop.f32.mrf.mxu0
        %v1585 = vadd.f32 %v1257, %v1584
        %v1586 = vpop.f32.mrf.mxu0
        %1587 = vmatprep.mubr.bf16.mxu0 0
        %1588 = vmatmul.mubr.bf16.gmra.mxu0 %v1234
        %v1589 = vpop.f32.mrf.mxu0
        %v1590 = vadd.f32 %v1257, %v1589
        %v1591 = vpop.f32.mrf.mxu0
        %v1592 = vpop.f32.mrf.mxu0
        %v1593 = vadd.f32 %v1257, %v1592
        %v1594 = vpop.f32.mrf.mxu0
        %1595 = vdwg.mxu0
        %v1596 = vmax.f32 %v1342, 0.0
        %v1597 = vmax.f32 %v1345, 0.0
        %v1598 = vmax.f32 %v1350, 0.0
        %v1599 = vmax.f32 %v1353, 0.0
        %v1600 = vmax.f32 %v1358, 0.0
        %v1601 = vmax.f32 %v1361, 0.0
        %v1602 = vmax.f32 %v1366, 0.0
        %v1603 = vmax.f32 %v1369, 0.0
        %v1604 = vmax.f32 %v1374, 0.0
        %v1605 = vmax.f32 %v1377, 0.0
        %v1606 = vmax.f32 %v1382, 0.0
        %v1607 = vmax.f32 %v1385, 0.0
        %v1608 = vmax.f32 %v1390, 0.0
        %v1609 = vmax.f32 %v1393, 0.0
        %v1610 = vmax.f32 %v1398, 0.0
        %v1611 = vmax.f32 %v1401, 0.0
        %v1612 = vmax.f32 %v1406, 0.0
        %v1613 = vmax.f32 %v1409, 0.0
        %v1614 = vmax.f32 %v1414, 0.0
        %v1615 = vmax.f32 %v1417, 0.0
        %v1616 = vmax.f32 %v1422, 0.0
        %v1617 = vmax.f32 %v1425, 0.0
        %v1618 = vmax.f32 %v1430, 0.0
        %v1619 = vmax.f32 %v1433, 0.0
        %v1620 = vmax.f32 %v1438, 0.0
        %v1621 = vmax.f32 %v1441, 0.0
        %v1622 = vmax.f32 %v1446, 0.0
        %v1623 = vmax.f32 %v1449, 0.0
        %v1624 = vmax.f32 %v1454, 0.0
        %v1625 = vmax.f32 %v1457, 0.0
        %v1626 = vmax.f32 %v1462, 0.0
        %v1627 = vmax.f32 %v1465, 0.0
        %v1628 = vmax.f32 %v1470, 0.0
        %v1629 = vmax.f32 %v1473, 0.0
        %v1630 = vmax.f32 %v1478, 0.0
        %v1631 = vmax.f32 %v1481, 0.0
        %v1632 = vmax.f32 %v1486, 0.0
        %v1633 = vmax.f32 %v1489, 0.0
        %v1634 = vmax.f32 %v1494, 0.0
        %v1635 = vmax.f32 %v1497, 0.0
        %v1636 = vmax.f32 %v1502, 0.0
        %v1637 = vmax.f32 %v1505, 0.0
        %v1638 = vmax.f32 %v1510, 0.0
        %v1639 = vmax.f32 %v1513, 0.0
        %v1640 = vmax.f32 %v1518, 0.0
        %v1641 = vmax.f32 %v1521, 0.0
        %v1642 = vmax.f32 %v1526, 0.0
        %v1643 = vmax.f32 %v1529, 0.0
        %v1644 = vmax.f32 %v1534, 0.0
        %v1645 = vmax.f32 %v1537, 0.0
        %v1646 = vmax.f32 %v1542, 0.0
        %v1647 = vmax.f32 %v1545, 0.0
        %v1648 = vmax.f32 %v1550, 0.0
        %v1649 = vmax.f32 %v1553, 0.0
        %v1650 = vmax.f32 %v1558, 0.0
        %v1651 = vmax.f32 %v1561, 0.0
        %v1652 = vmax.f32 %v1566, 0.0
        %v1653 = vmax.f32 %v1569, 0.0
        %v1654 = vmax.f32 %v1574, 0.0
        %v1655 = vmax.f32 %v1577, 0.0
        %v1656 = vmax.f32 %v1582, 0.0
        %v1657 = vmax.f32 %v1585, 0.0
        %v1658 = vmax.f32 %v1590, 0.0
        %v1659 = vmax.f32 %v1593, 0.0
        %v1660 = vpack.c.bf16 %v1597, %v1596
        %v1661 = vpack.c.bf16 %v1599, %v1598
        %v1662 = vpack.c.bf16 %v1601, %v1600
        %v1663 = vpack.c.bf16 %v1603, %v1602
        %v1664 = vpack.c.bf16 %v1605, %v1604
        %v1665 = vpack.c.bf16 %v1607, %v1606
        %v1666 = vpack.c.bf16 %v1609, %v1608
        %v1667 = vpack.c.bf16 %v1611, %v1610
        %v1668 = vpack.c.bf16 %v1613, %v1612
        %v1669 = vpack.c.bf16 %v1615, %v1614
        %v1670 = vpack.c.bf16 %v1617, %v1616
        %v1671 = vpack.c.bf16 %v1619, %v1618
        %v1672 = vpack.c.bf16 %v1621, %v1620
        %v1673 = vpack.c.bf16 %v1623, %v1622
        %v1674 = vpack.c.bf16 %v1625, %v1624
        %v1675 = vpack.c.bf16 %v1627, %v1626
        %v1676 = vpack.c.bf16 %v1629, %v1628
        %v1677 = vpack.c.bf16 %v1631, %v1630
        %v1678 = vpack.c.bf16 %v1633, %v1632
        %v1679 = vpack.c.bf16 %v1635, %v1634
        %v1680 = vpack.c.bf16 %v1637, %v1636
        %v1681 = vpack.c.bf16 %v1639, %v1638
        %v1682 = vpack.c.bf16 %v1641, %v1640
        %v1683 = vpack.c.bf16 %v1643, %v1642
        %v1684 = vpack.c.bf16 %v1645, %v1644
        %v1685 = vpack.c.bf16 %v1647, %v1646
        %v1686 = vpack.c.bf16 %v1649, %v1648
        %v1687 = vpack.c.bf16 %v1651, %v1650
        %v1688 = vpack.c.bf16 %v1653, %v1652
        %v1689 = vpack.c.bf16 %v1655, %v1654
        %v1690 = vpack.c.bf16 %v1657, %v1656
        %v1691 = vpack.c.bf16 %v1659, %v1658
        %s1692 = scalar_lea.vmem %s2, 64
        %v1693 = vld [vmem:[%s1692] sm:$0xf]
        %v1694 = vld [vmem:[%s1692 + $0x4] sm:$0xf]
        %v1695 = vld [vmem:[%s1692 + $0x8] sm:$0xf]
        %v1696 = vld [vmem:[%s1692 + $0xc] sm:$0xf]
        %v1697 = vld [vmem:[%s1692 + $0x10] sm:$0xf]
        %v1698 = vld [vmem:[%s1692 + $0x14] sm:$0xf]
        %v1699 = vld [vmem:[%s1692 + $0x18] sm:$0xf]
        %v1700 = vld [vmem:[%s1692 + $0x1c] sm:$0xf]
        %v1701 = vld [vmem:[%s1692 + $0x20] sm:$0xf]
        %v1702 = vld [vmem:[%s1692 + $0x24] sm:$0xf]
        %v1703 = vld [vmem:[%s1692 + $0x28] sm:$0xf]
        %v1704 = vld [vmem:[%s1692 + $0x2c] sm:$0xf]
        %v1705 = vld [vmem:[%s1692 + $0x30] sm:$0xf]
        %v1706 = vld [vmem:[%s1692 + $0x34] sm:$0xf]
        %v1707 = vld [vmem:[%s1692 + $0x38] sm:$0xf]
        %v1708 = vld [vmem:[%s1692 + $0x3c] sm:$0xf]
        %s1709 = scalar_lea.vmem %s3, 2
        %v1710 = vld [vmem:[%s1709] sm:$0x1]
        %v1712 = vlaneseq
        %v1713 = vshrl.u32 %v1712, 7
        %v1714 = vsub.s32 0, %v1713
        %v1715 = vrot.slane %v1710, %v1714
        %v1733 = vunpack.c.l.b16 %v1693
        %v1734 = vunpack.c.l.b16 %v1694
        %v1735 = vunpack.c.l.b16 %v1695
        %v1736 = vunpack.c.l.b16 %v1696
        %v1737 = vunpack.c.l.b16 %v1697
        %v1738 = vunpack.c.l.b16 %v1698
        %v1739 = vunpack.c.l.b16 %v1699
        %v1740 = vunpack.c.l.b16 %v1700
        %v1741 = vunpack.c.l.b16 %v1701
        %v1742 = vunpack.c.l.b16 %v1702
        %v1743 = vunpack.c.l.b16 %v1703
        %v1744 = vunpack.c.l.b16 %v1704
        %v1745 = vunpack.c.l.b16 %v1705
        %v1746 = vunpack.c.l.b16 %v1706
        %v1747 = vunpack.c.l.b16 %v1707
        %v1748 = vunpack.c.l.b16 %v1708
        %v1749 = vpack.c.b16 %v1734, %v1733
        %v1750 = vpack.c.b16 %v1736, %v1735
        %v1751 = vpack.c.b16 %v1738, %v1737
        %v1752 = vpack.c.b16 %v1740, %v1739
        %v1753 = vpack.c.b16 %v1742, %v1741
        %v1754 = vpack.c.b16 %v1744, %v1743
        %v1755 = vpack.c.b16 %v1746, %v1745
        %v1756 = vpack.c.b16 %v1748, %v1747
        %1765 = vmatprep.subr.bf16.mxu0 0
        %1766 = vmatpush1.bf16.msra.mxu0 %v1756
        %1767 = vmatprep.subr.bf16.mxu0 0
        %1768 = vmatpush1.bf16.msra.mxu0 %v1755
        %1769 = vmatprep.subr.bf16.mxu0 0
        %1770 = vmatpush1.bf16.msra.mxu0 %v1754
        %1771 = vmatprep.subr.bf16.mxu0 0
        %1772 = vmatpush1.bf16.msra.mxu0 %v1753
        %1773 = vmatprep.subr.bf16.mxu0 0
        %1774 = vmatpush1.bf16.msra.mxu0 %v1752
        %1775 = vmatprep.subr.bf16.mxu0 0
        %1776 = vmatpush1.bf16.msra.mxu0 %v1751
        %1777 = vmatprep.subr.bf16.mxu0 0
        %1778 = vmatpush1.bf16.msra.mxu0 %v1750
        %1779 = vmatprep.subr.bf16.mxu0 0
        %1780 = vmatpush1.bf16.msra.mxu0 %v1749
        %1781 = vmatprep.subr.bf16.mxu0 0
        %1782 = vmatpush2.bf16.msra.mxu0 0
        %1783 = vmatprep.subr.bf16.mxu0 0
        %1784 = vmatpush2.bf16.msra.mxu0 0
        %1785 = vmatprep.subr.bf16.mxu0 0
        %1786 = vmatpush2.bf16.msra.mxu0 0
        %1787 = vmatprep.subr.bf16.mxu0 0
        %1788 = vmatpush2.bf16.msra.mxu0 0
        %1789 = vmatprep.subr.bf16.mxu0 0
        %1790 = vmatpush2.bf16.msra.mxu0 0
        %1791 = vmatprep.subr.bf16.mxu0 0
        %1792 = vmatpush2.bf16.msra.mxu0 0
        %1793 = vmatprep.subr.bf16.mxu0 0
        %1794 = vmatpush2.bf16.msra.mxu0 0
        %1795 = vmatprep.subr.bf16.mxu0 0
        %1796 = vmatpush2.bf16.msra.mxu0 0
        %1797 = vmatprep.mubr.bf16.mxu0 0
        %1798 = vmatmul.mubr.bf16.gmra.mxu0 %v1660
        %v1799 = vpop.f32.mrf.mxu0
        %v1800 = vadd.f32 %v1715, %v1799
        %v1801 = vpop.f32.mrf.mxu0
        %v1802 = vpop.f32.mrf.mxu0
        %v1803 = vadd.f32 %v1715, %v1802
        %v1804 = vpop.f32.mrf.mxu0
        %1805 = vmatprep.mubr.bf16.mxu0 0
        %1806 = vmatmul.mubr.bf16.gmra.mxu0 %v1661
        %v1807 = vpop.f32.mrf.mxu0
        %v1808 = vadd.f32 %v1715, %v1807
        %v1809 = vpop.f32.mrf.mxu0
        %v1810 = vpop.f32.mrf.mxu0
        %v1811 = vadd.f32 %v1715, %v1810
        %v1812 = vpop.f32.mrf.mxu0
        %1813 = vmatprep.mubr.bf16.mxu0 0
        %1814 = vmatmul.mubr.bf16.gmra.mxu0 %v1662
        %v1815 = vpop.f32.mrf.mxu0
        %v1816 = vadd.f32 %v1715, %v1815
        %v1817 = vpop.f32.mrf.mxu0
        %v1818 = vpop.f32.mrf.mxu0
        %v1819 = vadd.f32 %v1715, %v1818
        %v1820 = vpop.f32.mrf.mxu0
        %1821 = vmatprep.mubr.bf16.mxu0 0
        %1822 = vmatmul.mubr.bf16.gmra.mxu0 %v1663
        %v1823 = vpop.f32.mrf.mxu0
        %v1824 = vadd.f32 %v1715, %v1823
        %v1825 = vpop.f32.mrf.mxu0
        %v1826 = vpop.f32.mrf.mxu0
        %v1827 = vadd.f32 %v1715, %v1826
        %v1828 = vpop.f32.mrf.mxu0
        %1829 = vmatprep.mubr.bf16.mxu0 0
        %1830 = vmatmul.mubr.bf16.gmra.mxu0 %v1664
        %v1831 = vpop.f32.mrf.mxu0
        %v1832 = vadd.f32 %v1715, %v1831
        %v1833 = vpop.f32.mrf.mxu0
        %v1834 = vpop.f32.mrf.mxu0
        %v1835 = vadd.f32 %v1715, %v1834
        %v1836 = vpop.f32.mrf.mxu0
        %1837 = vmatprep.mubr.bf16.mxu0 0
        %1838 = vmatmul.mubr.bf16.gmra.mxu0 %v1665
        %v1839 = vpop.f32.mrf.mxu0
        %v1840 = vadd.f32 %v1715, %v1839
        %v1841 = vpop.f32.mrf.mxu0
        %v1842 = vpop.f32.mrf.mxu0
        %v1843 = vadd.f32 %v1715, %v1842
        %v1844 = vpop.f32.mrf.mxu0
        %1845 = vmatprep.mubr.bf16.mxu0 0
        %1846 = vmatmul.mubr.bf16.gmra.mxu0 %v1666
        %v1847 = vpop.f32.mrf.mxu0
        %v1848 = vadd.f32 %v1715, %v1847
        %v1849 = vpop.f32.mrf.mxu0
        %v1850 = vpop.f32.mrf.mxu0
        %v1851 = vadd.f32 %v1715, %v1850
        %v1852 = vpop.f32.mrf.mxu0
        %1853 = vmatprep.mubr.bf16.mxu0 0
        %1854 = vmatmul.mubr.bf16.gmra.mxu0 %v1667
        %v1855 = vpop.f32.mrf.mxu0
        %v1856 = vadd.f32 %v1715, %v1855
        %v1857 = vpop.f32.mrf.mxu0
        %v1858 = vpop.f32.mrf.mxu0
        %v1859 = vadd.f32 %v1715, %v1858
        %v1860 = vpop.f32.mrf.mxu0
        %1861 = vmatprep.mubr.bf16.mxu0 0
        %1862 = vmatmul.mubr.bf16.gmra.mxu0 %v1668
        %v1863 = vpop.f32.mrf.mxu0
        %v1864 = vadd.f32 %v1715, %v1863
        %v1865 = vpop.f32.mrf.mxu0
        %v1866 = vpop.f32.mrf.mxu0
        %v1867 = vadd.f32 %v1715, %v1866
        %v1868 = vpop.f32.mrf.mxu0
        %1869 = vmatprep.mubr.bf16.mxu0 0
        %1870 = vmatmul.mubr.bf16.gmra.mxu0 %v1669
        %v1871 = vpop.f32.mrf.mxu0
        %v1872 = vadd.f32 %v1715, %v1871
        %v1873 = vpop.f32.mrf.mxu0
        %v1874 = vpop.f32.mrf.mxu0
        %v1875 = vadd.f32 %v1715, %v1874
        %v1876 = vpop.f32.mrf.mxu0
        %1877 = vmatprep.mubr.bf16.mxu0 0
        %1878 = vmatmul.mubr.bf16.gmra.mxu0 %v1670
        %v1879 = vpop.f32.mrf.mxu0
        %v1880 = vadd.f32 %v1715, %v1879
        %v1881 = vpop.f32.mrf.mxu0
        %v1882 = vpop.f32.mrf.mxu0
        %v1883 = vadd.f32 %v1715, %v1882
        %v1884 = vpop.f32.mrf.mxu0
        %1885 = vmatprep.mubr.bf16.mxu0 0
        %1886 = vmatmul.mubr.bf16.gmra.mxu0 %v1671
        %v1887 = vpop.f32.mrf.mxu0
        %v1888 = vadd.f32 %v1715, %v1887
        %v1889 = vpop.f32.mrf.mxu0
        %v1890 = vpop.f32.mrf.mxu0
        %v1891 = vadd.f32 %v1715, %v1890
        %v1892 = vpop.f32.mrf.mxu0
        %1893 = vmatprep.mubr.bf16.mxu0 0
        %1894 = vmatmul.mubr.bf16.gmra.mxu0 %v1672
        %v1895 = vpop.f32.mrf.mxu0
        %v1896 = vadd.f32 %v1715, %v1895
        %v1897 = vpop.f32.mrf.mxu0
        %v1898 = vpop.f32.mrf.mxu0
        %v1899 = vadd.f32 %v1715, %v1898
        %v1900 = vpop.f32.mrf.mxu0
        %1901 = vmatprep.mubr.bf16.mxu0 0
        %1902 = vmatmul.mubr.bf16.gmra.mxu0 %v1673
        %v1903 = vpop.f32.mrf.mxu0
        %v1904 = vadd.f32 %v1715, %v1903
        %v1905 = vpop.f32.mrf.mxu0
        %v1906 = vpop.f32.mrf.mxu0
        %v1907 = vadd.f32 %v1715, %v1906
        %v1908 = vpop.f32.mrf.mxu0
        %1909 = vmatprep.mubr.bf16.mxu0 0
        %1910 = vmatmul.mubr.bf16.gmra.mxu0 %v1674
        %v1911 = vpop.f32.mrf.mxu0
        %v1912 = vadd.f32 %v1715, %v1911
        %v1913 = vpop.f32.mrf.mxu0
        %v1914 = vpop.f32.mrf.mxu0
        %v1915 = vadd.f32 %v1715, %v1914
        %v1916 = vpop.f32.mrf.mxu0
        %1917 = vmatprep.mubr.bf16.mxu0 0
        %1918 = vmatmul.mubr.bf16.gmra.mxu0 %v1675
        %v1919 = vpop.f32.mrf.mxu0
        %v1920 = vadd.f32 %v1715, %v1919
        %v1921 = vpop.f32.mrf.mxu0
        %v1922 = vpop.f32.mrf.mxu0
        %v1923 = vadd.f32 %v1715, %v1922
        %v1924 = vpop.f32.mrf.mxu0
        %1925 = vmatprep.mubr.bf16.mxu0 0
        %1926 = vmatmul.mubr.bf16.gmra.mxu0 %v1676
        %v1927 = vpop.f32.mrf.mxu0
        %v1928 = vadd.f32 %v1715, %v1927
        %v1929 = vpop.f32.mrf.mxu0
        %v1930 = vpop.f32.mrf.mxu0
        %v1931 = vadd.f32 %v1715, %v1930
        %v1932 = vpop.f32.mrf.mxu0
        %1933 = vmatprep.mubr.bf16.mxu0 0
        %1934 = vmatmul.mubr.bf16.gmra.mxu0 %v1677
        %v1935 = vpop.f32.mrf.mxu0
        %v1936 = vadd.f32 %v1715, %v1935
        %v1937 = vpop.f32.mrf.mxu0
        %v1938 = vpop.f32.mrf.mxu0
        %v1939 = vadd.f32 %v1715, %v1938
        %v1940 = vpop.f32.mrf.mxu0
        %1941 = vmatprep.mubr.bf16.mxu0 0
        %1942 = vmatmul.mubr.bf16.gmra.mxu0 %v1678
        %v1943 = vpop.f32.mrf.mxu0
        %v1944 = vadd.f32 %v1715, %v1943
        %v1945 = vpop.f32.mrf.mxu0
        %v1946 = vpop.f32.mrf.mxu0
        %v1947 = vadd.f32 %v1715, %v1946
        %v1948 = vpop.f32.mrf.mxu0
        %1949 = vmatprep.mubr.bf16.mxu0 0
        %1950 = vmatmul.mubr.bf16.gmra.mxu0 %v1679
        %v1951 = vpop.f32.mrf.mxu0
        %v1952 = vadd.f32 %v1715, %v1951
        %v1953 = vpop.f32.mrf.mxu0
        %v1954 = vpop.f32.mrf.mxu0
        %v1955 = vadd.f32 %v1715, %v1954
        %v1956 = vpop.f32.mrf.mxu0
        %1957 = vmatprep.mubr.bf16.mxu0 0
        %1958 = vmatmul.mubr.bf16.gmra.mxu0 %v1680
        %v1959 = vpop.f32.mrf.mxu0
        %v1960 = vadd.f32 %v1715, %v1959
        %v1961 = vpop.f32.mrf.mxu0
        %v1962 = vpop.f32.mrf.mxu0
        %v1963 = vadd.f32 %v1715, %v1962
        %v1964 = vpop.f32.mrf.mxu0
        %1965 = vmatprep.mubr.bf16.mxu0 0
        %1966 = vmatmul.mubr.bf16.gmra.mxu0 %v1681
        %v1967 = vpop.f32.mrf.mxu0
        %v1968 = vadd.f32 %v1715, %v1967
        %v1969 = vpop.f32.mrf.mxu0
        %v1970 = vpop.f32.mrf.mxu0
        %v1971 = vadd.f32 %v1715, %v1970
        %v1972 = vpop.f32.mrf.mxu0
        %1973 = vmatprep.mubr.bf16.mxu0 0
        %1974 = vmatmul.mubr.bf16.gmra.mxu0 %v1682
        %v1975 = vpop.f32.mrf.mxu0
        %v1976 = vadd.f32 %v1715, %v1975
        %v1977 = vpop.f32.mrf.mxu0
        %v1978 = vpop.f32.mrf.mxu0
        %v1979 = vadd.f32 %v1715, %v1978
        %v1980 = vpop.f32.mrf.mxu0
        %1981 = vmatprep.mubr.bf16.mxu0 0
        %1982 = vmatmul.mubr.bf16.gmra.mxu0 %v1683
        %v1983 = vpop.f32.mrf.mxu0
        %v1984 = vadd.f32 %v1715, %v1983
        %v1985 = vpop.f32.mrf.mxu0
        %v1986 = vpop.f32.mrf.mxu0
        %v1987 = vadd.f32 %v1715, %v1986
        %v1988 = vpop.f32.mrf.mxu0
        %1989 = vmatprep.mubr.bf16.mxu0 0
        %1990 = vmatmul.mubr.bf16.gmra.mxu0 %v1684
        %v1991 = vpop.f32.mrf.mxu0
        %v1992 = vadd.f32 %v1715, %v1991
        %v1993 = vpop.f32.mrf.mxu0
        %v1994 = vpop.f32.mrf.mxu0
        %v1995 = vadd.f32 %v1715, %v1994
        %v1996 = vpop.f32.mrf.mxu0
        %1997 = vmatprep.mubr.bf16.mxu0 0
        %1998 = vmatmul.mubr.bf16.gmra.mxu0 %v1685
        %v1999 = vpop.f32.mrf.mxu0
        %v2000 = vadd.f32 %v1715, %v1999
        %v2001 = vpop.f32.mrf.mxu0
        %v2002 = vpop.f32.mrf.mxu0
        %v2003 = vadd.f32 %v1715, %v2002
        %v2004 = vpop.f32.mrf.mxu0
        %2005 = vmatprep.mubr.bf16.mxu0 0
        %2006 = vmatmul.mubr.bf16.gmra.mxu0 %v1686
        %v2007 = vpop.f32.mrf.mxu0
        %v2008 = vadd.f32 %v1715, %v2007
        %v2009 = vpop.f32.mrf.mxu0
        %v2010 = vpop.f32.mrf.mxu0
        %v2011 = vadd.f32 %v1715, %v2010
        %v2012 = vpop.f32.mrf.mxu0
        %2013 = vmatprep.mubr.bf16.mxu0 0
        %2014 = vmatmul.mubr.bf16.gmra.mxu0 %v1687
        %v2015 = vpop.f32.mrf.mxu0
        %v2016 = vadd.f32 %v1715, %v2015
        %v2017 = vpop.f32.mrf.mxu0
        %v2018 = vpop.f32.mrf.mxu0
        %v2019 = vadd.f32 %v1715, %v2018
        %v2020 = vpop.f32.mrf.mxu0
        %2021 = vmatprep.mubr.bf16.mxu0 0
        %2022 = vmatmul.mubr.bf16.gmra.mxu0 %v1688
        %v2023 = vpop.f32.mrf.mxu0
        %v2024 = vadd.f32 %v1715, %v2023
        %v2025 = vpop.f32.mrf.mxu0
        %v2026 = vpop.f32.mrf.mxu0
        %v2027 = vadd.f32 %v1715, %v2026
        %v2028 = vpop.f32.mrf.mxu0
        %2029 = vmatprep.mubr.bf16.mxu0 0
        %2030 = vmatmul.mubr.bf16.gmra.mxu0 %v1689
        %v2031 = vpop.f32.mrf.mxu0
        %v2032 = vadd.f32 %v1715, %v2031
        %v2033 = vpop.f32.mrf.mxu0
        %v2034 = vpop.f32.mrf.mxu0
        %v2035 = vadd.f32 %v1715, %v2034
        %v2036 = vpop.f32.mrf.mxu0
        %2037 = vmatprep.mubr.bf16.mxu0 0
        %2038 = vmatmul.mubr.bf16.gmra.mxu0 %v1690
        %v2039 = vpop.f32.mrf.mxu0
        %v2040 = vadd.f32 %v1715, %v2039
        %v2041 = vpop.f32.mrf.mxu0
        %v2042 = vpop.f32.mrf.mxu0
        %v2043 = vadd.f32 %v1715, %v2042
        %v2044 = vpop.f32.mrf.mxu0
        %2045 = vmatprep.mubr.bf16.mxu0 0
        %2046 = vmatmul.mubr.bf16.gmra.mxu0 %v1691
        %v2047 = vpop.f32.mrf.mxu0
        %v2048 = vadd.f32 %v1715, %v2047
        %v2049 = vpop.f32.mrf.mxu0
        %v2050 = vpop.f32.mrf.mxu0
        %v2051 = vadd.f32 %v1715, %v2050
        %v2052 = vpop.f32.mrf.mxu0
        %2053 = vdwg.mxu0
        %v2054 = vmax.f32 %v1800, 0.0
        %v2055 = vmax.f32 %v1803, 0.0
        %v2056 = vmax.f32 %v1808, 0.0
        %v2057 = vmax.f32 %v1811, 0.0
        %v2058 = vmax.f32 %v1816, 0.0
        %v2059 = vmax.f32 %v1819, 0.0
        %v2060 = vmax.f32 %v1824, 0.0
        %v2061 = vmax.f32 %v1827, 0.0
        %v2062 = vmax.f32 %v1832, 0.0
        %v2063 = vmax.f32 %v1835, 0.0
        %v2064 = vmax.f32 %v1840, 0.0
        %v2065 = vmax.f32 %v1843, 0.0
        %v2066 = vmax.f32 %v1848, 0.0
        %v2067 = vmax.f32 %v1851, 0.0
        %v2068 = vmax.f32 %v1856, 0.0
        %v2069 = vmax.f32 %v1859, 0.0
        %v2070 = vmax.f32 %v1864, 0.0
        %v2071 = vmax.f32 %v1867, 0.0
        %v2072 = vmax.f32 %v1872, 0.0
        %v2073 = vmax.f32 %v1875, 0.0
        %v2074 = vmax.f32 %v1880, 0.0
        %v2075 = vmax.f32 %v1883, 0.0
        %v2076 = vmax.f32 %v1888, 0.0
        %v2077 = vmax.f32 %v1891, 0.0
        %v2078 = vmax.f32 %v1896, 0.0
        %v2079 = vmax.f32 %v1899, 0.0
        %v2080 = vmax.f32 %v1904, 0.0
        %v2081 = vmax.f32 %v1907, 0.0
        %v2082 = vmax.f32 %v1912, 0.0
        %v2083 = vmax.f32 %v1915, 0.0
        %v2084 = vmax.f32 %v1920, 0.0
        %v2085 = vmax.f32 %v1923, 0.0
        %v2086 = vmax.f32 %v1928, 0.0
        %v2087 = vmax.f32 %v1931, 0.0
        %v2088 = vmax.f32 %v1936, 0.0
        %v2089 = vmax.f32 %v1939, 0.0
        %v2090 = vmax.f32 %v1944, 0.0
        %v2091 = vmax.f32 %v1947, 0.0
        %v2092 = vmax.f32 %v1952, 0.0
        %v2093 = vmax.f32 %v1955, 0.0
        %v2094 = vmax.f32 %v1960, 0.0
        %v2095 = vmax.f32 %v1963, 0.0
        %v2096 = vmax.f32 %v1968, 0.0
        %v2097 = vmax.f32 %v1971, 0.0
        %v2098 = vmax.f32 %v1976, 0.0
        %v2099 = vmax.f32 %v1979, 0.0
        %v2100 = vmax.f32 %v1984, 0.0
        %v2101 = vmax.f32 %v1987, 0.0
        %v2102 = vmax.f32 %v1992, 0.0
        %v2103 = vmax.f32 %v1995, 0.0
        %v2104 = vmax.f32 %v2000, 0.0
        %v2105 = vmax.f32 %v2003, 0.0
        %v2106 = vmax.f32 %v2008, 0.0
        %v2107 = vmax.f32 %v2011, 0.0
        %v2108 = vmax.f32 %v2016, 0.0
        %v2109 = vmax.f32 %v2019, 0.0
        %v2110 = vmax.f32 %v2024, 0.0
        %v2111 = vmax.f32 %v2027, 0.0
        %v2112 = vmax.f32 %v2032, 0.0
        %v2113 = vmax.f32 %v2035, 0.0
        %v2114 = vmax.f32 %v2040, 0.0
        %v2115 = vmax.f32 %v2043, 0.0
        %v2116 = vmax.f32 %v2048, 0.0
        %v2117 = vmax.f32 %v2051, 0.0
        %v2118 = vmax.f32 %v2054, %v2058
        %v2119 = vmax.f32 %v2055, %v2059
        %v2120 = vmax.f32 %v2056, %v2060
        %v2121 = vmax.f32 %v2057, %v2061
        %v2122 = vmax.f32 %v2118, %v2062
        %v2123 = vmax.f32 %v2119, %v2063
        %v2124 = vmax.f32 %v2120, %v2064
        %v2125 = vmax.f32 %v2121, %v2065
        %v2126 = vmax.f32 %v2122, %v2066
        %v2127 = vmax.f32 %v2123, %v2067
        %v2128 = vmax.f32 %v2124, %v2068
        %v2129 = vmax.f32 %v2125, %v2069
        %v2130 = vmax.f32 %v2126, %v2127
        %v2131 = vmax.f32 %v2128, %v2129
        %v2132 = vmax.f32 %v2130, %v2131
        %v2133 = vrot.slane %v2132, 4
        %v2134 = vmax.f32 %v2132, %v2133
        %v2135 = vrot.slane %v2134, 2
        %v2136 = vmax.f32 %v2134, %v2135
        %v2137 = vrot.slane %v2136, 1
        %v2138 = vmax.f32 %v2136, %v2137
        %v2139 = vld [vmem:[#allocation2] sm:$0x1]
        %v2140 = vmax.f32 %v2139, %v2138
        %2141 = vst [vmem:[#allocation2] sm:$0x1] %v2140
        %v2142 = vmax.f32 %v2070, %v2074
        %v2143 = vmax.f32 %v2071, %v2075
        %v2144 = vmax.f32 %v2072, %v2076
        %v2145 = vmax.f32 %v2073, %v2077
        %v2146 = vmax.f32 %v2142, %v2078
        %v2147 = vmax.f32 %v2143, %v2079
        %v2148 = vmax.f32 %v2144, %v2080
        %v2149 = vmax.f32 %v2145, %v2081
        %v2150 = vmax.f32 %v2146, %v2082
        %v2151 = vmax.f32 %v2147, %v2083
        %v2152 = vmax.f32 %v2148, %v2084
        %v2153 = vmax.f32 %v2149, %v2085
        %v2154 = vmax.f32 %v2150, %v2151
        %v2155 = vmax.f32 %v2152, %v2153
        %v2156 = vmax.f32 %v2154, %v2155
        %v2157 = vrot.slane %v2156, 4
        %v2158 = vmax.f32 %v2156, %v2157
        %v2159 = vrot.slane %v2158, 2
        %v2160 = vmax.f32 %v2158, %v2159
        %v2161 = vrot.slane %v2160, 1
        %v2162 = vmax.f32 %v2160, %v2161
        %v2163 = vld [vmem:[#allocation2 + $0x1] sm:$0x1]
        %v2164 = vmax.f32 %v2163, %v2162
        %2165 = vst [vmem:[#allocation2 + $0x1] sm:$0x1] %v2164
        %v2166 = vmax.f32 %v2086, %v2090
        %v2167 = vmax.f32 %v2087, %v2091
        %v2168 = vmax.f32 %v2088, %v2092
        %v2169 = vmax.f32 %v2089, %v2093
        %v2170 = vmax.f32 %v2166, %v2094
        %v2171 = vmax.f32 %v2167, %v2095
        %v2172 = vmax.f32 %v2168, %v2096
        %v2173 = vmax.f32 %v2169, %v2097
        %v2174 = vmax.f32 %v2170, %v2098
        %v2175 = vmax.f32 %v2171, %v2099
        %v2176 = vmax.f32 %v2172, %v2100
        %v2177 = vmax.f32 %v2173, %v2101
        %v2178 = vmax.f32 %v2174, %v2175
        %v2179 = vmax.f32 %v2176, %v2177
        %v2180 = vmax.f32 %v2178, %v2179
        %v2181 = vrot.slane %v2180, 4
        %v2182 = vmax.f32 %v2180, %v2181
        %v2183 = vrot.slane %v2182, 2
        %v2184 = vmax.f32 %v2182, %v2183
        %v2185 = vrot.slane %v2184, 1
        %v2186 = vmax.f32 %v2184, %v2185
        %v2187 = vld [vmem:[#allocation2 + $0x2] sm:$0x1]
        %v2188 = vmax.f32 %v2187, %v2186
        %2189 = vst [vmem:[#allocation2 + $0x2] sm:$0x1] %v2188
        %v2190 = vmax.f32 %v2102, %v2106
        %v2191 = vmax.f32 %v2103, %v2107
        %v2192 = vmax.f32 %v2104, %v2108
        %v2193 = vmax.f32 %v2105, %v2109
        %v2194 = vmax.f32 %v2190, %v2110
        %v2195 = vmax.f32 %v2191, %v2111
        %v2196 = vmax.f32 %v2192, %v2112
        %v2197 = vmax.f32 %v2193, %v2113
        %v2198 = vmax.f32 %v2194, %v2114
        %v2199 = vmax.f32 %v2195, %v2115
        %v2200 = vmax.f32 %v2196, %v2116
        %v2201 = vmax.f32 %v2197, %v2117
        %v2202 = vmax.f32 %v2198, %v2199
        %v2203 = vmax.f32 %v2200, %v2201
        %v2204 = vmax.f32 %v2202, %v2203
        %v2205 = vrot.slane %v2204, 4
        %v2206 = vmax.f32 %v2204, %v2205
        %v2207 = vrot.slane %v2206, 2
        %v2208 = vmax.f32 %v2206, %v2207
        %v2209 = vrot.slane %v2208, 1
        %v2210 = vmax.f32 %v2208, %v2209
        %v2211 = vld [vmem:[#allocation2 + $0x3] sm:$0x1]
        %v2212 = vmax.f32 %v2211, %v2210
        %2213 = vst [vmem:[#allocation2 + $0x3] sm:$0x1] %v2212
        %p2214 = scmp.eq.s32.totalorder %s20, 1
        // Predicated region
        $region82: #{raw_coefficient_net_v0.1} parent=72 // pred_check
          %p2215 = pneg %p2214
        $region83: #{raw_coefficient_net_v0.1} parent=72 // pred_check_branch
          %2217 = sbr.rel (%p2215) target = $region85
        $region84: #{raw_coefficient_net_v0.1} parent=72 // pred_region
          %v2218 = vld [vmem:[#allocation2] sm:$0xf]
          %v2219 = vpack.c.bf16 %v2218, %v2218
          %s2220 = scalar_lea.vmem %s2, 128
          %v2221 = vld [vmem:[%s2220] sm:$0xf]
          %v2222 = vld [vmem:[%s2220 + $0x4] sm:$0xf]
          %v2223 = vld [vmem:[%s2220 + $0x8] sm:$0xf]
          %v2224 = vld [vmem:[%s2220 + $0xc] sm:$0xf]
          %v2225 = vld [vmem:[%s2220 + $0x10] sm:$0xf]
          %v2226 = vld [vmem:[%s2220 + $0x14] sm:$0xf]
          %v2227 = vld [vmem:[%s2220 + $0x18] sm:$0xf]
          %v2228 = vld [vmem:[%s2220 + $0x1c] sm:$0xf]
          %v2229 = vld [vmem:[%s2220 + $0x20] sm:$0xf]
          %v2230 = vld [vmem:[%s2220 + $0x24] sm:$0xf]
          %v2231 = vld [vmem:[%s2220 + $0x28] sm:$0xf]
          %v2232 = vld [vmem:[%s2220 + $0x2c] sm:$0xf]
          %v2233 = vld [vmem:[%s2220 + $0x30] sm:$0xf]
          %v2234 = vld [vmem:[%s2220 + $0x34] sm:$0xf]
          %v2235 = vld [vmem:[%s2220 + $0x38] sm:$0xf]
          %v2236 = vld [vmem:[%s2220 + $0x3c] sm:$0xf]
          %s2237 = scalar_lea.vmem %s3, 3
          %v2238 = vld [vmem:[%s2237] sm:$0x1]
          %v2240 = vlaneseq
          %v2241 = vshrl.u32 %v2240, 7
          %v2242 = vsub.s32 0, %v2241
          %v2243 = vrot.slane %v2238, %v2242
          %v2261 = vunpack.c.l.b16 %v2221
          %v2262 = vunpack.c.l.b16 %v2222
          %v2263 = vunpack.c.l.b16 %v2223
          %v2264 = vunpack.c.l.b16 %v2224
          %v2265 = vunpack.c.l.b16 %v2225
          %v2266 = vunpack.c.l.b16 %v2226
          %v2267 = vunpack.c.l.b16 %v2227
          %v2268 = vunpack.c.l.b16 %v2228
          %v2269 = vunpack.c.l.b16 %v2229
          %v2270 = vunpack.c.l.b16 %v2230
          %v2271 = vunpack.c.l.b16 %v2231
          %v2272 = vunpack.c.l.b16 %v2232
          %v2273 = vunpack.c.l.b16 %v2233
          %v2274 = vunpack.c.l.b16 %v2234
          %v2275 = vunpack.c.l.b16 %v2235
          %v2276 = vunpack.c.l.b16 %v2236
          %v2277 = vpack.c.b16 %v2262, %v2261
          %v2278 = vpack.c.b16 %v2264, %v2263
          %v2279 = vpack.c.b16 %v2266, %v2265
          %v2280 = vpack.c.b16 %v2268, %v2267
          %v2281 = vpack.c.b16 %v2270, %v2269
          %v2282 = vpack.c.b16 %v2272, %v2271
          %v2283 = vpack.c.b16 %v2274, %v2273
          %v2284 = vpack.c.b16 %v2276, %v2275
          %2293 = vmatprep.subr.bf16.mxu0 0
          %2294 = vmatpush1.bf16.msra.mxu0 %v2284
          %2295 = vmatprep.subr.bf16.mxu0 0
          %2296 = vmatpush1.bf16.msra.mxu0 %v2283
          %2297 = vmatprep.subr.bf16.mxu0 0
          %2298 = vmatpush1.bf16.msra.mxu0 %v2282
          %2299 = vmatprep.subr.bf16.mxu0 0
          %2300 = vmatpush1.bf16.msra.mxu0 %v2281
          %2301 = vmatprep.subr.bf16.mxu0 0
          %2302 = vmatpush1.bf16.msra.mxu0 %v2280
          %2303 = vmatprep.subr.bf16.mxu0 0
          %2304 = vmatpush1.bf16.msra.mxu0 %v2279
          %2305 = vmatprep.subr.bf16.mxu0 0
          %2306 = vmatpush1.bf16.msra.mxu0 %v2278
          %2307 = vmatprep.subr.bf16.mxu0 0
          %2308 = vmatpush1.bf16.msra.mxu0 %v2277
          %2309 = vmatprep.subr.bf16.mxu0 0
          %2310 = vmatpush2.bf16.msra.mxu0 0
          %2311 = vmatprep.subr.bf16.mxu0 0
          %2312 = vmatpush2.bf16.msra.mxu0 0
          %2313 = vmatprep.subr.bf16.mxu0 0
          %2314 = vmatpush2.bf16.msra.mxu0 0
          %2315 = vmatprep.subr.bf16.mxu0 0
          %2316 = vmatpush2.bf16.msra.mxu0 0
          %2317 = vmatprep.subr.bf16.mxu0 0
          %2318 = vmatpush2.bf16.msra.mxu0 0
          %2319 = vmatprep.subr.bf16.mxu0 0
          %2320 = vmatpush2.bf16.msra.mxu0 0
          %2321 = vmatprep.subr.bf16.mxu0 0
          %2322 = vmatpush2.bf16.msra.mxu0 0
          %2323 = vmatprep.subr.bf16.mxu0 0
          %2324 = vmatpush2.bf16.msra.mxu0 0
          %2325 = vmatprep.mubr.bf16.mxu0 0
          %2326 = vmatmul.mubr.bf16.gmra.mxu0 %v2219
          %v2327 = vpop.f32.mrf.mxu0
          %v2328 = vadd.f32 %v2243, %v2327
          %v2329 = vpop.f32.mrf.mxu0
          %v2330 = vpop.f32.mrf.mxu0
          %v2331 = vpop.f32.mrf.mxu0
          %2332 = vdwg.mxu0
          %v2333 = vmax.f32 %v2328, 0.0
          %v2334 = vpack.c.bf16 %v2333, %v2333
          %s2335 = scalar_lea.vmem %s2, 192
          %v2336 = vld [vmem:[%s2335] sm:$0xf]
          %v2337 = vld [vmem:[%s2335 + $0x4] sm:$0xf]
          %v2338 = vld [vmem:[%s2335 + $0x8] sm:$0xf]
          %v2339 = vld [vmem:[%s2335 + $0xc] sm:$0xf]
          %v2340 = vld [vmem:[%s2335 + $0x10] sm:$0xf]
          %v2341 = vld [vmem:[%s2335 + $0x14] sm:$0xf]
          %v2342 = vld [vmem:[%s2335 + $0x18] sm:$0xf]
          %v2343 = vld [vmem:[%s2335 + $0x1c] sm:$0xf]
          %v2344 = vld [vmem:[%s2335 + $0x20] sm:$0xf]
          %v2345 = vld [vmem:[%s2335 + $0x24] sm:$0xf]
          %v2346 = vld [vmem:[%s2335 + $0x28] sm:$0xf]
          %v2347 = vld [vmem:[%s2335 + $0x2c] sm:$0xf]
          %v2348 = vld [vmem:[%s2335 + $0x30] sm:$0xf]
          %v2349 = vld [vmem:[%s2335 + $0x34] sm:$0xf]
          %v2350 = vld [vmem:[%s2335 + $0x38] sm:$0xf]
          %v2351 = vld [vmem:[%s2335 + $0x3c] sm:$0xf]
          %s2352 = scalar_lea.vmem %s3, 4
          %v2353 = vld [vmem:[%s2352] sm:$0x1]
          %v2355 = vlaneseq
          %v2356 = vshrl.u32 %v2355, 7
          %v2357 = vsub.s32 0, %v2356
          %v2358 = vrot.slane %v2353, %v2357
          %v2376 = vunpack.c.l.b16 %v2336
          %v2377 = vunpack.c.l.b16 %v2337
          %v2378 = vunpack.c.l.b16 %v2338
          %v2379 = vunpack.c.l.b16 %v2339
          %v2380 = vunpack.c.l.b16 %v2340
          %v2381 = vunpack.c.l.b16 %v2341
          %v2382 = vunpack.c.l.b16 %v2342
          %v2383 = vunpack.c.l.b16 %v2343
          %v2384 = vunpack.c.l.b16 %v2344
          %v2385 = vunpack.c.l.b16 %v2345
          %v2386 = vunpack.c.l.b16 %v2346
          %v2387 = vunpack.c.l.b16 %v2347
          %v2388 = vunpack.c.l.b16 %v2348
          %v2389 = vunpack.c.l.b16 %v2349
          %v2390 = vunpack.c.l.b16 %v2350
          %v2391 = vunpack.c.l.b16 %v2351
          %v2392 = vpack.c.b16 %v2377, %v2376
          %v2393 = vpack.c.b16 %v2379, %v2378
          %v2394 = vpack.c.b16 %v2381, %v2380
          %v2395 = vpack.c.b16 %v2383, %v2382
          %v2396 = vpack.c.b16 %v2385, %v2384
          %v2397 = vpack.c.b16 %v2387, %v2386
          %v2398 = vpack.c.b16 %v2389, %v2388
          %v2399 = vpack.c.b16 %v2391, %v2390
          %2408 = vmatprep.subr.bf16.mxu0 0
          %2409 = vmatpush1.bf16.msra.mxu0 %v2399
          %2410 = vmatprep.subr.bf16.mxu0 0
          %2411 = vmatpush1.bf16.msra.mxu0 %v2398
          %2412 = vmatprep.subr.bf16.mxu0 0
          %2413 = vmatpush1.bf16.msra.mxu0 %v2397
          %2414 = vmatprep.subr.bf16.mxu0 0
          %2415 = vmatpush1.bf16.msra.mxu0 %v2396
          %2416 = vmatprep.subr.bf16.mxu0 0
          %2417 = vmatpush1.bf16.msra.mxu0 %v2395
          %2418 = vmatprep.subr.bf16.mxu0 0
          %2419 = vmatpush1.bf16.msra.mxu0 %v2394
          %2420 = vmatprep.subr.bf16.mxu0 0
          %2421 = vmatpush1.bf16.msra.mxu0 %v2393
          %2422 = vmatprep.subr.bf16.mxu0 0
          %2423 = vmatpush1.bf16.msra.mxu0 %v2392
          %2424 = vmatprep.subr.bf16.mxu0 0
          %2425 = vmatpush2.bf16.msra.mxu0 0
          %2426 = vmatprep.subr.bf16.mxu0 0
          %2427 = vmatpush2.bf16.msra.mxu0 0
          %2428 = vmatprep.subr.bf16.mxu0 0
          %2429 = vmatpush2.bf16.msra.mxu0 0
          %2430 = vmatprep.subr.bf16.mxu0 0
          %2431 = vmatpush2.bf16.msra.mxu0 0
          %2432 = vmatprep.subr.bf16.mxu0 0
          %2433 = vmatpush2.bf16.msra.mxu0 0
          %2434 = vmatprep.subr.bf16.mxu0 0
          %2435 = vmatpush2.bf16.msra.mxu0 0
          %2436 = vmatprep.subr.bf16.mxu0 0
          %2437 = vmatpush2.bf16.msra.mxu0 0
          %2438 = vmatprep.subr.bf16.mxu0 0
          %2439 = vmatpush2.bf16.msra.mxu0 0
          %2440 = vmatprep.mubr.bf16.mxu0 0
          %2441 = vmatmul.mubr.bf16.gmra.mxu0 %v2334
          %v2442 = vpop.f32.mrf.mxu0
          %v2443 = vadd.f32 %v2358, %v2442
          %v2444 = vpop.f32.mrf.mxu0
          %v2445 = vpop.f32.mrf.mxu0
          %v2446 = vpop.f32.mrf.mxu0
          %2447 = vdwg.mxu0
          %v2448 = vmax.f32 %v2443, 0.0
          %v2449 = vpack.c.bf16 %v2448, %v2448
          %s2450 = scalar_lea.vmem %s2, 256
          %v2451 = vld [vmem:[%s2450] sm:$0xf]
          %v2452 = vld [vmem:[%s2450 + $0x4] sm:$0xf]
          %v2453 = vld [vmem:[%s2450 + $0x8] sm:$0xf]
          %v2454 = vld [vmem:[%s2450 + $0xc] sm:$0xf]
          %v2455 = vld [vmem:[%s2450 + $0x10] sm:$0xf]
          %v2456 = vld [vmem:[%s2450 + $0x14] sm:$0xf]
          %v2457 = vld [vmem:[%s2450 + $0x18] sm:$0xf]
          %v2458 = vld [vmem:[%s2450 + $0x1c] sm:$0xf]
          %v2459 = vld [vmem:[%s2450 + $0x20] sm:$0xf]
          %v2460 = vld [vmem:[%s2450 + $0x24] sm:$0xf]
          %v2461 = vld [vmem:[%s2450 + $0x28] sm:$0xf]
          %v2462 = vld [vmem:[%s2450 + $0x2c] sm:$0xf]
          %v2463 = vld [vmem:[%s2450 + $0x30] sm:$0xf]
          %v2464 = vld [vmem:[%s2450 + $0x34] sm:$0xf]
          %v2465 = vld [vmem:[%s2450 + $0x38] sm:$0xf]
          %v2466 = vld [vmem:[%s2450 + $0x3c] sm:$0xf]
          %s2467 = scalar_lea.vmem %s3, 5
          %v2468 = vld [vmem:[%s2467] sm:$0x1]
          %v2470 = vlaneseq
          %v2471 = vshrl.u32 %v2470, 7
          %v2472 = vsub.s32 0, %v2471
          %v2473 = vrot.slane %v2468, %v2472
          %v2491 = vunpack.c.l.b16 %v2451
          %v2492 = vunpack.c.l.b16 %v2452
          %v2493 = vunpack.c.l.b16 %v2453
          %v2494 = vunpack.c.l.b16 %v2454
          %v2495 = vunpack.c.l.b16 %v2455
          %v2496 = vunpack.c.l.b16 %v2456
          %v2497 = vunpack.c.l.b16 %v2457
          %v2498 = vunpack.c.l.b16 %v2458
          %v2499 = vunpack.c.l.b16 %v2459
          %v2500 = vunpack.c.l.b16 %v2460
          %v2501 = vunpack.c.l.b16 %v2461
          %v2502 = vunpack.c.l.b16 %v2462
          %v2503 = vunpack.c.l.b16 %v2463
          %v2504 = vunpack.c.l.b16 %v2464
          %v2505 = vunpack.c.l.b16 %v2465
          %v2506 = vunpack.c.l.b16 %v2466
          %v2507 = vpack.c.b16 %v2492, %v2491
          %v2508 = vpack.c.b16 %v2494, %v2493
          %v2509 = vpack.c.b16 %v2496, %v2495
          %v2510 = vpack.c.b16 %v2498, %v2497
          %v2511 = vpack.c.b16 %v2500, %v2499
          %v2512 = vpack.c.b16 %v2502, %v2501
          %v2513 = vpack.c.b16 %v2504, %v2503
          %v2514 = vpack.c.b16 %v2506, %v2505
          %2523 = vmatprep.subr.bf16.mxu0 0
          %2524 = vmatpush1.bf16.msra.mxu0 %v2514
          %2525 = vmatprep.subr.bf16.mxu0 0
          %2526 = vmatpush1.bf16.msra.mxu0 %v2513
          %2527 = vmatprep.subr.bf16.mxu0 0
          %2528 = vmatpush1.bf16.msra.mxu0 %v2512
          %2529 = vmatprep.subr.bf16.mxu0 0
          %2530 = vmatpush1.bf16.msra.mxu0 %v2511
          %2531 = vmatprep.subr.bf16.mxu0 0
          %2532 = vmatpush1.bf16.msra.mxu0 %v2510
          %2533 = vmatprep.subr.bf16.mxu0 0
          %2534 = vmatpush1.bf16.msra.mxu0 %v2509
          %2535 = vmatprep.subr.bf16.mxu0 0
          %2536 = vmatpush1.bf16.msra.mxu0 %v2508
          %2537 = vmatprep.subr.bf16.mxu0 0
          %2538 = vmatpush1.bf16.msra.mxu0 %v2507
          %2539 = vmatprep.subr.bf16.mxu0 0
          %2540 = vmatpush2.bf16.msra.mxu0 0
          %2541 = vmatprep.subr.bf16.mxu0 0
          %2542 = vmatpush2.bf16.msra.mxu0 0
          %2543 = vmatprep.subr.bf16.mxu0 0
          %2544 = vmatpush2.bf16.msra.mxu0 0
          %2545 = vmatprep.subr.bf16.mxu0 0
          %2546 = vmatpush2.bf16.msra.mxu0 0
          %2547 = vmatprep.subr.bf16.mxu0 0
          %2548 = vmatpush2.bf16.msra.mxu0 0
          %2549 = vmatprep.subr.bf16.mxu0 0
          %2550 = vmatpush2.bf16.msra.mxu0 0
          %2551 = vmatprep.subr.bf16.mxu0 0
          %2552 = vmatpush2.bf16.msra.mxu0 0
          %2553 = vmatprep.subr.bf16.mxu0 0
          %2554 = vmatpush2.bf16.msra.mxu0 0
          %2555 = vmatprep.mubr.bf16.mxu0 0
          %2556 = vmatmul.mubr.bf16.gmra.mxu0 %v2449
          %v2557 = vpop.f32.mrf.mxu0
          %v2558 = vadd.f32 %v2473, %v2557
          %v2559 = vpop.f32.mrf.mxu0
          %v2560 = vpop.f32.mrf.mxu0
          %v2561 = vpop.f32.mrf.mxu0
          %2562 = vdwg.mxu0
          %v2563 = vtanh.pop %v2558
          %2564 = vst [vmem:[%s510] sm:$0xf] %v2563
        $region85: #{raw_coefficient_net_v0.1} parent=72 // pred_fallthru
          _
        %p2565 = scmp.lt.s32.totalorder %s19, 1
        %s2566 = scalar_select %p2565, %s19, 1
        %s2567 = smul.addr %s2566, 4
        %s2568 = scalar_lea.vmem %s4, %s2567
        // Predicated region
        $region86: #{raw_coefficient_net_v0.1} parent=72 // pred_check
          %p2569 = pneg %p136
        $region87: #{raw_coefficient_net_v0.1} parent=72 // pred_check_branch
          %2571 = sbr.rel (%p2569) target = $region89
        $region88: #{raw_coefficient_net_v0.1} parent=72 // pred_region
          _
        $region89: #{raw_coefficient_net_v0.1} parent=72 // pred_fallthru
          _
      $region73: #{raw_coefficient_net_v0.1} parent=5 // pred_fallthru
        _
      %p2572 = scmp.le.s32.totalorder 2, %s10
      // Predicated region
      $region90: #{raw_coefficient_net_v0.1} parent=5 // pred_check
        %p2573 = pneg %p2572
      $region91: #{raw_coefficient_net_v0.1} parent=5 // pred_check_branch
        %2575 = sbr.rel (%p2573) target = $region93
      $region92: #{raw_coefficient_net_v0.1} parent=5 // pred_region
        %s2576 = ssub.s32 %s10, 2
        // Predicated region
        $region94: #{raw_coefficient_net_v0.1} parent=92 // pred_check
          %p2577 = pneg %p142
        $region95: #{raw_coefficient_net_v0.1} parent=92 // pred_check_branch
          %2579 = sbr.rel (%p2577) target = $region97
        $region96: #{raw_coefficient_net_v0.1} parent=92 // pred_region
          %p2580 = scmp.lt.s32.totalorder %s21, 1
          %s2581 = scalar_select %p2580, %s21, 1
          %s2582 = smul.addr %s2581, 4
          %s2583 = scalar_lea.vmem %s4, %s2582
        $region97: #{raw_coefficient_net_v0.1} parent=92 // pred_fallthru
          _
      $region93: #{raw_coefficient_net_v0.1} parent=5 // pred_fallthru
        _
    $region6: #{raw_coefficient_net_v0.1} parent=1 // loop_footer
      %s14 = sadd.s32 1, %s10
    $region7: #{raw_coefficient_net_v0.1} parent=1 // loop_footer_branch
      %9 = sbr.rel target = $region3
    $region8: #{raw_coefficient_net_v0.1} parent=1 // loop_exit
      _

</llo_original>
